<compile_context>
chip_gen: v7x
topology: tpu7x:2x2x1
jax: 0.10.0
libtpu: 0.0.40
codegen_flags: <defaults>
</compile_context>

<pallas_src>
import numpy as np

import jax
import jax.numpy as jnp
from jax.experimental import pallas as pl
from jax.experimental.pallas import tpu as pltpu

EPS = 1e-8       # WF2 fusion eps
BN_EPS = 1e-5    # nn.BatchNorm2d default eps


# ---------------------------------------------------------------------------
# Constant 2x bilinear (align_corners=False) upsample matrices.
# _upsample_1d(n) returns (n, 2n) with out[j] = sum_i in[i] * M[i, j]
# (polyphase 0.25/0.75 taps, edge clamp baked in).  The full 2-D upsample on
# the flattened (H*W) spatial axis is the Kronecker product of the H and W
# matrices: U[y*W+x, y2*W2+x2] = U_H[y, y2] * U_W[x, x2].
# ---------------------------------------------------------------------------
def _upsample_1d(n):
    m = np.zeros((n, 2 * n), np.float32)
    for j in range(2 * n):
        i, par = divmod(j, 2)
        if par == 0:                       # out[2i]   = .25*in[i-1] + .75*in[i]
            m[max(i - 1, 0), j] += 0.25
            m[i, j] += 0.75
        else:                              # out[2i+1] = .75*in[i]   + .25*in[i+1]
            m[i, j] += 0.75
            m[min(i + 1, n - 1), j] += 0.25
    return m


def _upsample_kron(H, W):
    return jnp.asarray(np.kron(_upsample_1d(H), _upsample_1d(W)))   # (HW, S2)


# ---------------------------------------------------------------------------
# Grid-invariant boundary masks for the 8 non-center 3x3 taps (precomputed
# once in the wrapper, streamed in as a constant (8, S2) input).
# Row order matches the kernel's (dy outer, dx inner, center skipped) loop.
# ---------------------------------------------------------------------------
def _tap_masks(H2, W2):
    S2 = H2 * W2
    y2 = np.arange(S2) // W2
    x2 = np.arange(S2) % W2
    rows = []
    for dy in range(3):
        for dx in range(3):
            if dy == 1 and dx == 1:
                continue
            m = np.ones(S2, bool)
            if dy == 0:
                m &= y2 >= 1
            if dy == 2:
                m &= y2 <= H2 - 2
            if dx == 0:
                m &= x2 >= 1
            if dx == 2:
                m &= x2 <= W2 - 2
            rows.append(m)
    return jnp.asarray(np.stack(rows).astype(np.float32))           # (8, S2)


# ---------------------------------------------------------------------------
# Fully fused kernel factory (closes over the static shape constants).
# ---------------------------------------------------------------------------
def _make_wf2_kernel(W2, S2):
    def kernel(fw0_ref, x_ref, res_ref, wpre_ref, u_ref, w3_ref, bias_ref,
               mask_ref, o_ref):
        # ---- 1x1 pre_conv (fuse weight fw1 + batch block-diag folded in) ----
        # (Bt*Cout, Bt*Cin) @ (Bt*Cin, HW) -> (Bt*Cout, HW)
        pre = jnp.dot(wpre_ref[...], x_ref[...],
                      preferred_element_type=jnp.float32)

        # ---- 2x bilinear upsample (H + W + interleave + clamp) in ONE matmul
        # (Bt*Cout, HW) @ (HW, S2) -> (Bt*Cout, S2); stays in vregs.
        up = jnp.dot(pre, u_ref[...], preferred_element_type=jnp.float32)

        # ---- weighted fuse: fw0 * res + fw1 * up(pre)  (fw1 pre-folded) -----
        fused = fw0_ref[0] * res_ref[...] + up                      # (BC, S2)

        # ---- 3x3 conv (stride 1, pad 1) as ONE matmul on a rolled im2col ----
        # 8 lane rolls (XLU) + 8 precomputed-mask multiplies (VPU); each tap is
        # exactly 8 sublanes so the concat is clean vreg stacking.
        taps = []
        mi = 0
        for dy in range(3):
            for dx in range(3):
                off = (dy - 1) * W2 + (dx - 1)
                if off == 0:
                    taps.append(fused)
                else:
                    t = pltpu.roll(fused, shift=(-off) % S2, axis=1)
                    taps.append(t * mask_ref[mi:mi + 1, :])
                    mi += 1
        cols = jnp.concatenate(taps, axis=0)                        # (9*BC, S2)
        y = jnp.dot(w3_ref[...], cols,
                    preferred_element_type=jnp.float32)             # (BC, S2)

        # ---- folded BatchNorm (eval) bias + ReLU6, lane-dense store ---------
        o_ref[...] = jnp.clip(y + bias_ref[...], 0.0, 6.0)

    return kernel


# ---------------------------------------------------------------------------
# Batch-tile picker: largest divisor of B whose per-step working set stays
# comfortably inside VMEM (conservative estimate incl. im2col temporaries).
# ---------------------------------------------------------------------------
def _pick_batch_tile(B, Cin, Cout, HW, S2, budget_bytes=8 * 1024 * 1024):
    best = 1
    for bt in range(1, B + 1):
        if B % bt:
            continue
        per = 4 * (2 * bt * Cin * HW          # x (double-buffered)
                   + 4 * bt * Cout * S2       # res + out (double-buffered)
                   + 22 * bt * Cout * S2)     # fused / taps / cols temporaries
        if per <= budget_bytes:
            best = bt
    return best


# ---------------------------------------------------------------------------
# Parameters (deterministic, synthetic)
# ---------------------------------------------------------------------------
def init_params(in_channels, out_channels):
    cin, cout = in_channels, out_channels
    w_pre = 0.3 * jnp.sin(jnp.arange(cout * cin, dtype=jnp.float32)
                          ).reshape(cout, cin)                       # (Cout, Cin)
    wts = jnp.ones((2,), jnp.float32)                                # WF2 weights
    w_post = 0.2 * jnp.cos(jnp.arange(cout * cout * 9, dtype=jnp.float32)
                           ).reshape(cout, cout, 3, 3)               # (O, I, 3, 3)
    gamma = 1.0 + 0.1 * jnp.arange(cout, dtype=jnp.float32)
    beta = 0.05 * jnp.arange(cout, dtype=jnp.float32)
    running_mean = 0.01 * jnp.arange(cout, dtype=jnp.float32)
    running_var = 1.0 + 0.02 * jnp.arange(cout, dtype=jnp.float32)
    return dict(w_pre=w_pre, wts=wts, w_post=w_post, gamma=gamma, beta=beta,
                running_mean=running_mean, running_var=running_var)


# ---------------------------------------------------------------------------
# Wrapper (NCHW in / NCHW out, like the PyTorch module). Only free reshapes.
# ---------------------------------------------------------------------------
def wf2_forward(x, res, params, batch_tile=None):
    B, Cin, H, W = x.shape
    Cout = res.shape[1]
    H2, W2 = 2 * H, 2 * W
    assert res.shape == (B, Cout, H2, W2)
    HW, S2 = H * W, H2 * W2

    Bt = batch_tile or _pick_batch_tile(B, Cin, Cout, HW, S2)
    G = B // Bt
    BC_in, BC = Bt * Cin, Bt * Cout

    # Batch items stacked on SUBLANES (channel axis) -> vregs are filled with
    # real data (Bt*Cout rows) instead of padding; spatial stays lane-dense.
    x2 = x.reshape(G, BC_in, HW).astype(jnp.float32)      # free reshape
    res2 = res.reshape(G, BC, S2).astype(jnp.float32)     # free reshape

    # Fusion weights: relu + normalize (2 elements, done once outside).
    w = jnp.maximum(params["wts"], 0.0)
    fw = w / (jnp.sum(w) + EPS)
    fw0 = fw[0].reshape(1)                                # scalar via SMEM

    eye_bt = jnp.eye(Bt, dtype=jnp.float32)

    # Fold fw1 into the 1x1 weights, expand block-diagonally over the batch
    # sublane stacking: (Bt*Cout, Bt*Cin).
    w_pre = params["w_pre"].astype(jnp.float32) * fw[1]
    w_pre_big = jnp.einsum("oi,bd->bodi", w_pre, eye_bt).reshape(BC, BC_in)

    # Fold BatchNorm (inference / running stats) into the 3x3 weights + bias.
    # TODO(synk): PyTorch default train-mode BN uses batch statistics; this
    # implements eval-mode BN with running stats (the standard inference path).
    scale = params["gamma"] / jnp.sqrt(params["running_var"] + BN_EPS)
    bias = params["beta"] - params["running_mean"] * scale
    bias_big = jnp.tile(bias, Bt).reshape(BC, 1)

    # torch (O, I, kh, kw) -> w9[o, 3*dy+dx, i], BN scale folded, then expanded
    # block-structurally over the batch stacking: (Bt*Cout, 9*Bt*Cout), column
    # index = tap*(Bt*Cout) + b*Cout + ci (matches the kernel's im2col concat).
    w9 = jnp.transpose(params["w_post"], (0, 2, 3, 1)).reshape(Cout, 9, Cout)
    w9 = w9 * scale[:, None, None]
    w3_big = jnp.einsum("okc,bd->bokdc", w9, eye_bt).reshape(BC, 9 * BC)

    U = _upsample_kron(H, W)                              # (HW, S2) constant
    masks = _tap_masks(H2, W2)                            # (8, S2) constant

    kernel = _make_wf2_kernel(W2, S2)

    # vmem_limit: 48 MiB is safe on every generation (v7x physical VMEM is
    # 64 MiB; v5e/v6e have 128 MiB) while leaving headroom for double-buffers.
    out = pl.pallas_call(
        kernel,
        out_shape=jax.ShapeDtypeStruct((G, BC, S2), jnp.float32),
        grid=(G,),
        in_specs=[
            pl.BlockSpec((1,), lambda g: (0,),
                         memory_space=pltpu.MemorySpace.SMEM),    # fw0 scalar
            pl.BlockSpec((None, BC_in, HW), lambda g: (g, 0, 0)),  # x (flat)
            pl.BlockSpec((None, BC, S2), lambda g: (g, 0, 0)),     # res (flat)
            pl.BlockSpec((BC, BC_in), lambda g: (0, 0)),           # 1x1 weights
            pl.BlockSpec((HW, S2), lambda g: (0, 0)),              # upsample mat
            pl.BlockSpec((BC, 9 * BC), lambda g: (0, 0)),          # 3x3 weights
            pl.BlockSpec((BC, 1), lambda g: (0, 0)),               # BN bias
            pl.BlockSpec((8, S2), lambda g: (0, 0)),               # tap masks
        ],
        out_specs=pl.BlockSpec((None, BC, S2), lambda g: (g, 0, 0)),
        compiler_params=pltpu.CompilerParams(
            dimension_semantics=("parallel",),
            vmem_limit_bytes=48 * 1024 * 1024),
    )(fw0, x2, res2, w_pre_big, U, w3_big, bias_big, masks)

    return out.reshape(B, Cout, H2, W2)                   # free reshape


# ---------------------------------------------------------------------------
# Pure-JAX reference (XLA convs + jax.image.resize, independent of the kernel's
# upsample math) for the correctness check.
# ---------------------------------------------------------------------------
def wf2_reference(x, res, params):
    x1 = jax.lax.conv_general_dilated(
        x, params["w_pre"][:, :, None, None], window_strides=(1, 1),
        padding="VALID", dimension_numbers=("NCHW", "OIHW", "NCHW"))
    B, C, H, W = x1.shape
    xu = jax.image.resize(x1, (B, C, 2 * H, 2 * W), method="bilinear")
    w = jnp.maximum(params["wts"], 0.0)
    fw = w / (jnp.sum(w) + EPS)
    fused = fw[0] * res + fw[1] * xu
    y = jax.lax.conv_general_dilated(
        fused, params["w_post"], window_strides=(1, 1),
        padding=((1, 1), (1, 1)), dimension_numbers=("NCHW", "OIHW", "NCHW"))
    scale = params["gamma"] / jnp.sqrt(params["running_var"] + BN_EPS)
    bias = params["beta"] - params["running_mean"] * scale
    y = y * scale[None, :, None, None] + bias[None, :, None, None]
    return jnp.clip(y, 0.0, 6.0)


if __name__ == "__main__":
    B, Cin, Cout, H, W = 2, 8, 4, 16, 16
    key = jax.random.PRNGKey(0)
    kx, kr = jax.random.split(key)
    x = jax.random.normal(kx, (B, Cin, H, W), jnp.float32)
    res = jax.random.normal(kr, (B, Cout, 2 * H, 2 * W), jnp.float32)
    params = init_params(Cin, Cout)

    out = jax.block_until_ready(wf2_forward(x, res, params))
    assert out.shape == (B, Cout, 2 * H, 2 * W)

    ref = jax.block_until_ready(wf2_reference(x, res, params))
    max_err = float(jnp.max(jnp.abs(out - ref)))
    if max_err > 2e-4:
        raise AssertionError(f"Pallas/reference mismatch, max abs err = {max_err}")

    print("KERNEL_OK")
</pallas_src>

<mosaic_0001>
module attributes {stable_mosaic.version = 11 : i64} {
  func.func @kernel(%arg0: i32, %arg1: memref<1xf32, #tpu.memory_space<smem>>, %arg2: memref<1x16x256xf32, #tpu.memory_space<vmem>>, %arg3: memref<1x8x1024xf32, #tpu.memory_space<vmem>>, %arg4: memref<8x16xf32, #tpu.memory_space<vmem>>, %arg5: memref<256x1024xf32, #tpu.memory_space<vmem>>, %arg6: memref<8x72xf32, #tpu.memory_space<vmem>>, %arg7: memref<8x1xf32, #tpu.memory_space<vmem>>, %arg8: memref<8x1024xf32, #tpu.memory_space<vmem>>, %arg9: memref<1x8x1024xf32, #tpu.memory_space<vmem>>) attributes {dimension_semantics = [#tpu.dimension_semantics<parallel>], iteration_bounds = array<i64: 1>, scalar_prefetch = 0 : i64, scratch_operands = 0 : i64, tpu.core_type = #tpu.core_type<tc>, window_params = [{transform_indices = @transform_0, window_bounds = array<i64: 1>}, {transform_indices = @transform_1, window_bounds = array<i64: 1, 16, 256>}, {transform_indices = @transform_2, window_bounds = array<i64: 1, 8, 1024>}, {pipeline_mode = #tpu.pipeline_mode<synchronous>, transform_indices = @transform_3, window_bounds = array<i64: 8, 16>}, {pipeline_mode = #tpu.pipeline_mode<synchronous>, transform_indices = @transform_4, window_bounds = array<i64: 256, 1024>}, {pipeline_mode = #tpu.pipeline_mode<synchronous>, transform_indices = @transform_5, window_bounds = array<i64: 8, 72>}, {pipeline_mode = #tpu.pipeline_mode<synchronous>, transform_indices = @transform_6, window_bounds = array<i64: 8, 1>}, {pipeline_mode = #tpu.pipeline_mode<synchronous>, transform_indices = @transform_7, window_bounds = array<i64: 8, 1024>}, {transform_indices = @transform_8, window_bounds = array<i64: 1, 8, 1024>}]} {
    %c0 = arith.constant 0 : index
    %c0_0 = arith.constant 0 : index
    %0 = vector.load %arg4[%c0, %c0_0] : memref<8x16xf32, #tpu.memory_space<vmem>>, vector<8x16xf32>
    %c0_1 = arith.constant 0 : index
    %c0_2 = arith.constant 0 : index
    %c0_3 = arith.constant 0 : index
    %1 = vector.load %arg2[%c0_1, %c0_2, %c0_3] : memref<1x16x256xf32, #tpu.memory_space<vmem>>, vector<1x16x256xf32>
    %2 = vector.shape_cast %1 : vector<1x16x256xf32> to vector<16x256xf32>
    %cst = arith.constant dense<0.000000e+00> : vector<8x256xf32>
    %3 = tpu.matmul %0, %2, %cst {dimension_numbers = #tpu.dot_dimension_numbers<[1], [0], [0], [1], [0, 0, 1, 1], [], []>} : vector<8x16xf32>, vector<16x256xf32>, vector<8x256xf32> -> vector<8x256xf32>
    %c0_4 = arith.constant 0 : index
    %c0_5 = arith.constant 0 : index
    %4 = vector.load %arg5[%c0_4, %c0_5] : memref<256x1024xf32, #tpu.memory_space<vmem>>, vector<256x1024xf32>
    %cst_6 = arith.constant dense<0.000000e+00> : vector<8x1024xf32>
    %5 = tpu.matmul %3, %4, %cst_6 {dimension_numbers = #tpu.dot_dimension_numbers<[1], [0], [0], [1], [0, 0, 1, 1], [], []>} : vector<8x256xf32>, vector<256x1024xf32>, vector<8x1024xf32> -> vector<8x1024xf32>
    %c0_7 = arith.constant 0 : index
    %6 = memref.load %arg1[%c0_7] : memref<1xf32, #tpu.memory_space<smem>>
    %c0_8 = arith.constant 0 : index
    %c0_9 = arith.constant 0 : index
    %c0_10 = arith.constant 0 : index
    %7 = vector.load %arg3[%c0_8, %c0_9, %c0_10] : memref<1x8x1024xf32, #tpu.memory_space<vmem>>, vector<1x8x1024xf32>
    %8 = vector.shape_cast %7 : vector<1x8x1024xf32> to vector<8x1024xf32>
    %9 = vector.broadcast %6 : f32 to vector<8x1024xf32>
    %10 = arith.mulf %9, %8 : vector<8x1024xf32>
    %11 = arith.addf %10, %5 : vector<8x1024xf32>
    %c33_i32 = arith.constant 33 : i32
    %12 = tpu.dynamic_rotate %11 by %c33_i32 dim 1 : vector<8x1024xf32>, i32 -> vector<8x1024xf32>
    %c0_11 = arith.constant 0 : index
    %c0_12 = arith.constant 0 : index
    %13 = vector.load %arg8[%c0_11, %c0_12] : memref<8x1024xf32, #tpu.memory_space<vmem>>, vector<1x1024xf32>
    %14 = vector.broadcast %13 : vector<1x1024xf32> to vector<8x1024xf32>
    %15 = arith.mulf %12, %14 : vector<8x1024xf32>
    %c32_i32 = arith.constant 32 : i32
    %16 = tpu.dynamic_rotate %11 by %c32_i32 dim 1 : vector<8x1024xf32>, i32 -> vector<8x1024xf32>
    %c1 = arith.constant 1 : index
    %c0_13 = arith.constant 0 : index
    %17 = vector.load %arg8[%c1, %c0_13] : memref<8x1024xf32, #tpu.memory_space<vmem>>, vector<1x1024xf32>
    %18 = vector.broadcast %17 : vector<1x1024xf32> to vector<8x1024xf32>
    %19 = arith.mulf %16, %18 : vector<8x1024xf32>
    %c31_i32 = arith.constant 31 : i32
    %20 = tpu.dynamic_rotate %11 by %c31_i32 dim 1 : vector<8x1024xf32>, i32 -> vector<8x1024xf32>
    %c2 = arith.constant 2 : index
    %c0_14 = arith.constant 0 : index
    %21 = vector.load %arg8[%c2, %c0_14] : memref<8x1024xf32, #tpu.memory_space<vmem>>, vector<1x1024xf32>
    %22 = vector.broadcast %21 : vector<1x1024xf32> to vector<8x1024xf32>
    %23 = arith.mulf %20, %22 : vector<8x1024xf32>
    %c1_i32 = arith.constant 1 : i32
    %24 = tpu.dynamic_rotate %11 by %c1_i32 dim 1 : vector<8x1024xf32>, i32 -> vector<8x1024xf32>
    %c3 = arith.constant 3 : index
    %c0_15 = arith.constant 0 : index
    %25 = vector.load %arg8[%c3, %c0_15] : memref<8x1024xf32, #tpu.memory_space<vmem>>, vector<1x1024xf32>
    %26 = vector.broadcast %25 : vector<1x1024xf32> to vector<8x1024xf32>
    %27 = arith.mulf %24, %26 : vector<8x1024xf32>
    %c1023_i32 = arith.constant 1023 : i32
    %28 = tpu.dynamic_rotate %11 by %c1023_i32 dim 1 : vector<8x1024xf32>, i32 -> vector<8x1024xf32>
    %c4 = arith.constant 4 : index
    %c0_16 = arith.constant 0 : index
    %29 = vector.load %arg8[%c4, %c0_16] : memref<8x1024xf32, #tpu.memory_space<vmem>>, vector<1x1024xf32>
    %30 = vector.broadcast %29 : vector<1x1024xf32> to vector<8x1024xf32>
    %31 = arith.mulf %28, %30 : vector<8x1024xf32>
    %c993_i32 = arith.constant 993 : i32
    %32 = tpu.dynamic_rotate %11 by %c993_i32 dim 1 : vector<8x1024xf32>, i32 -> vector<8x1024xf32>
    %c5 = arith.constant 5 : index
    %c0_17 = arith.constant 0 : index
    %33 = vector.load %arg8[%c5, %c0_17] : memref<8x1024xf32, #tpu.memory_space<vmem>>, vector<1x1024xf32>
    %34 = vector.broadcast %33 : vector<1x1024xf32> to vector<8x1024xf32>
    %35 = arith.mulf %32, %34 : vector<8x1024xf32>
    %c992_i32 = arith.constant 992 : i32
    %36 = tpu.dynamic_rotate %11 by %c992_i32 dim 1 : vector<8x1024xf32>, i32 -> vector<8x1024xf32>
    %c6 = arith.constant 6 : index
    %c0_18 = arith.constant 0 : index
    %37 = vector.load %arg8[%c6, %c0_18] : memref<8x1024xf32, #tpu.memory_space<vmem>>, vector<1x1024xf32>
    %38 = vector.broadcast %37 : vector<1x1024xf32> to vector<8x1024xf32>
    %39 = arith.mulf %36, %38 : vector<8x1024xf32>
    %c991_i32 = arith.constant 991 : i32
    %40 = tpu.dynamic_rotate %11 by %c991_i32 dim 1 : vector<8x1024xf32>, i32 -> vector<8x1024xf32>
    %c7 = arith.constant 7 : index
    %c0_19 = arith.constant 0 : index
    %41 = vector.load %arg8[%c7, %c0_19] : memref<8x1024xf32, #tpu.memory_space<vmem>>, vector<1x1024xf32>
    %42 = vector.broadcast %41 : vector<1x1024xf32> to vector<8x1024xf32>
    %43 = arith.mulf %40, %42 : vector<8x1024xf32>
    %44 = tpu.concatenate %15, %19, %23, %27, %11, %31, %35, %39, %43 in 0 : vector<8x1024xf32>, vector<8x1024xf32>, vector<8x1024xf32>, vector<8x1024xf32>, vector<8x1024xf32>, vector<8x1024xf32>, vector<8x1024xf32>, vector<8x1024xf32>, vector<8x1024xf32> -> vector<72x1024xf32>
    %c0_20 = arith.constant 0 : index
    %c0_21 = arith.constant 0 : index
    %45 = vector.load %arg6[%c0_20, %c0_21] : memref<8x72xf32, #tpu.memory_space<vmem>>, vector<8x72xf32>
    %cst_22 = arith.constant dense<0.000000e+00> : vector<8x1024xf32>
    %46 = tpu.matmul %45, %44, %cst_22 {dimension_numbers = #tpu.dot_dimension_numbers<[1], [0], [0], [1], [0, 0, 1, 1], [], []>} : vector<8x72xf32>, vector<72x1024xf32>, vector<8x1024xf32> -> vector<8x1024xf32>
    %c0_23 = arith.constant 0 : index
    %c0_24 = arith.constant 0 : index
    %47 = vector.load %arg7[%c0_23, %c0_24] : memref<8x1xf32, #tpu.memory_space<vmem>>, vector<8x1xf32>
    %48 = vector.broadcast %47 : vector<8x1xf32> to vector<8x1024xf32>
    %49 = arith.addf %46, %48 : vector<8x1024xf32>
    %cst_25 = arith.constant 0.000000e+00 : f32
    %cst_26 = arith.constant 6.000000e+00 : f32
    %50 = vector.broadcast %cst_25 : f32 to vector<8x1024xf32>
    %51 = arith.maximumf %50, %49 : vector<8x1024xf32>
    %52 = vector.broadcast %cst_26 : f32 to vector<8x1024xf32>
    %53 = arith.minimumf %52, %51 : vector<8x1024xf32>
    %c0_27 = arith.constant 0 : index
    %c0_28 = arith.constant 0 : index
    %c0_29 = arith.constant 0 : index
    %54 = vector.load %arg9[%c0_27, %c0_28, %c0_29] : memref<1x8x1024xf32, #tpu.memory_space<vmem>>, vector<1x8x1024xf32>
    %55 = vector.shape_cast %54 : vector<1x8x1024xf32> to vector<8x1024xf32>
    %56 = vector.shape_cast %53 : vector<8x1024xf32> to vector<1x8x1024xf32>
    tpu.vector_store %arg9[%c0_27, %c0_28, %c0_29], %56 {strides = array<i32>} : memref<1x8x1024xf32, #tpu.memory_space<vmem>>, vector<1x8x1024xf32>,
    return
  }
  func.func @transform_0(%arg0: i32) -> i32 {
    %c0_i32 = arith.constant 0 : i32
    %c0_i32_0 = arith.constant 0 : i32
    return %c0_i32 : i32
  }
  func.func @transform_1(%arg0: i32) -> (i32, i32, i32) {
    %c0_i32 = arith.constant 0 : i32
    %c0_i32_0 = arith.constant 0 : i32
    %c0_i32_1 = arith.constant 0 : i32
    return %arg0, %c0_i32, %c0_i32_0 : i32, i32, i32
  }
  func.func @transform_2(%arg0: i32) -> (i32, i32, i32) {
    %c0_i32 = arith.constant 0 : i32
    %c0_i32_0 = arith.constant 0 : i32
    %c0_i32_1 = arith.constant 0 : i32
    return %arg0, %c0_i32, %c0_i32_0 : i32, i32, i32
  }
  func.func @transform_3(%arg0: i32) -> (i32, i32) {
    %c0_i32 = arith.constant 0 : i32
    %c0_i32_0 = arith.constant 0 : i32
    %c0_i32_1 = arith.constant 0 : i32
    return %c0_i32, %c0_i32_0 : i32, i32
  }
  func.func @transform_4(%arg0: i32) -> (i32, i32) {
    %c0_i32 = arith.constant 0 : i32
    %c0_i32_0 = arith.constant 0 : i32
    %c0_i32_1 = arith.constant 0 : i32
    return %c0_i32, %c0_i32_0 : i32, i32
  }
  func.func @transform_5(%arg0: i32) -> (i32, i32) {
    %c0_i32 = arith.constant 0 : i32
    %c0_i32_0 = arith.constant 0 : i32
    %c0_i32_1 = arith.constant 0 : i32
    return %c0_i32, %c0_i32_0 : i32, i32
  }
  func.func @transform_6(%arg0: i32) -> (i32, i32) {
    %c0_i32 = arith.constant 0 : i32
    %c0_i32_0 = arith.constant 0 : i32
    %c0_i32_1 = arith.constant 0 : i32
    return %c0_i32, %c0_i32_0 : i32, i32
  }
  func.func @transform_7(%arg0: i32) -> (i32, i32) {
    %c0_i32 = arith.constant 0 : i32
    %c0_i32_0 = arith.constant 0 : i32
    %c0_i32_1 = arith.constant 0 : i32
    return %c0_i32, %c0_i32_0 : i32, i32
  }
  func.func @transform_8(%arg0: i32) -> (i32, i32, i32) {
    %c0_i32 = arith.constant 0 : i32
    %c0_i32_0 = arith.constant 0 : i32
    %c0_i32_1 = arith.constant 0 : i32
    return %arg0, %c0_i32, %c0_i32_0 : i32, i32, i32
  }
}

</mosaic_0001>

<llo_original>
// kernel: tpu_custom_call.1
$region0: #{tpu_custom_call.1}
  #allocation0 [shape = 'u32[]', space=smem, size = 0x4, offset = 0x4, fixed_abs, tag = 'smem constant byte address 0x4 - core index']
  #allocation1 [shape = 'u32[144,128]{1,0:T(1,128)}', space=vmem, size = 0x12000, scoped, tag = 'internal scratch']
  #allocation2 [shape = 'f32[1]{0:T(128)S(6)}', space=smem, size = 0x200, scoped, tag = 'scoped memory for tpu_custom_call.1']
  %s0 = inlined_call_operand.<no memory space> [shape: f32[1], index: 0, kind: input, shape index: {}]
  %s1 = inlined_call_operand.hbm [shape: f32[1,16,256], index: 1, kind: input, shape index: {}]
  %s2 = inlined_call_operand.hbm [shape: f32[1,8,1024], index: 2, kind: input, shape index: {}]
  %s3 = inlined_call_operand.vmem [shape: f32[8,16], index: 3, kind: input, shape index: {}]
  %s4 = inlined_call_operand.hbm [shape: f32[256,1024], index: 4, kind: input, shape index: {}]
  %s5 = inlined_call_operand.vmem [shape: f32[8,72], index: 5, kind: input, shape index: {}]
  %s6 = inlined_call_operand.vmem [shape: f32[8,1], index: 6, kind: input, shape index: {}]
  %s7 = inlined_call_operand.hbm [shape: f32[8,1024], index: 7, kind: input, shape index: {}]
  %s8 = inlined_call_operand.hbm [shape: f32[1,8,1024], index: 8, kind: output, shape index: {}]
  %s9 = sld [smem:[#allocation0]]
  $region58: #{tpu_custom_call.1} parent=0
    _
  %s11 = ssub.s32 1, %s9
  %s12 = scalar_select 0, %s11, %s9
  %13 = sst [smem:[#allocation2]] %s0
  $region1: #{tpu_custom_call.1} parent=0
    #allocation3 [shape = 'u8[16384]{0}', space=vmem, size = 0x4000, scoped, tag = 'input window, operand 1, single buffered']
    #allocation4 [shape = 's32[1]{0}', space=sflag, size = 0x4, scoped, tag = 'scoped memory for tpu_custom_call.1']
    #allocation5 [shape = 's32[1]{0}', space=sflag, size = 0x4, scoped, tag = 'scoped memory for tpu_custom_call.1']
    #allocation6 [shape = 'u8[32768]{0}', space=vmem, size = 0x8000, scoped, tag = 'input window, operand 2, single buffered']
    #allocation7 [shape = 's32[1]{0}', space=sflag, size = 0x4, scoped, tag = 'scoped memory for tpu_custom_call.1']
    #allocation8 [shape = 'u8[1048576]{0}', space=vmem, size = 0x100000, scoped, tag = 'input window, operand 4, single buffered']
    #allocation9 [shape = 'u8[32768]{0}', space=vmem, size = 0x8000, scoped, tag = 'input window, operand 7, single buffered']
    #allocation10 [shape = 's32[1]{0}', space=sflag, size = 0x4, scoped, tag = 'scoped memory for tpu_custom_call.1']
    #allocation11 [shape = 'u8[32768]{0}', space=vmem, size = 0x8000, scoped, tag = 'output window, operand 0, single buffered']
    %14 = vsyncpa [#allocation4], 0
    %15 = vsyncpa [#allocation7], 0
    %16 = vsyncpa [#allocation10], 0
    %17 = vsyncpa [#allocation5], 0
    // Predicated region
    $region2: #{tpu_custom_call.1} parent=1 // pred_check
      _
    $region3: #{tpu_custom_call.1} parent=1 // pred_check_branch
      %19 = sbr.rel (0) target = $region5
    $region4: #{tpu_custom_call.1} parent=1 // pred_region
      _
    $region5: #{tpu_custom_call.1} parent=1 // pred_fallthru
      _
    // Predicated region
    $region6: #{tpu_custom_call.1} parent=1 // pred_check
      _
    $region7: #{tpu_custom_call.1} parent=1 // pred_check_branch
      %21 = sbr.rel (0) target = $region9
    $region8: #{tpu_custom_call.1} parent=1 // pred_region
      %s23 = ssub.s32 512, 512
      %24 = vsyncadd [#allocation4], %s23
      %s25 = sshll.u32 [#allocation3], 4
      %s26 = int_to_ptr.vmem [resolvable:$true] %s25
      %31 = dma.hbm_to_vmem [thread:$0]  %s1, 512, %s26, [#allocation4], 256, 256, 16
    $region9: #{tpu_custom_call.1} parent=1 // pred_fallthru
      _
    // Predicated region
    $region10: #{tpu_custom_call.1} parent=1 // pred_check
      _
    $region11: #{tpu_custom_call.1} parent=1 // pred_check_branch
      %33 = sbr.rel (0) target = $region13
    $region12: #{tpu_custom_call.1} parent=1 // pred_region
      %s35 = ssub.s32 1024, 1024
      %36 = vsyncadd [#allocation7], %s35
      %s38 = sshll.u32 [#allocation6], 4
      %s39 = int_to_ptr.vmem [resolvable:$true] %s38
      %41 = dma.hbm_to_vmem [thread:$0]  %s2, 1024, %s39, [#allocation7]
    $region13: #{tpu_custom_call.1} parent=1 // pred_fallthru
      _
    // Predicated region
    $region14: #{tpu_custom_call.1} parent=1 // pred_check
      _
    $region15: #{tpu_custom_call.1} parent=1 // pred_check_branch
      %43 = sbr.rel (0) target = $region17
    $region16: #{tpu_custom_call.1} parent=1 // pred_region
      _
    $region17: #{tpu_custom_call.1} parent=1 // pred_fallthru
      _
    // Predicated region
    $region18: #{tpu_custom_call.1} parent=1 // pred_check
      _
    $region19: #{tpu_custom_call.1} parent=1 // pred_check_branch
      %45 = sbr.rel (0) target = $region21
    $region20: #{tpu_custom_call.1} parent=1 // pred_region
      %s47 = ssub.s32 32768, 32768
      %48 = vsyncadd [#allocation7], %s47
      %s49 = sshll.u32 [#allocation8], 4
      %s50 = int_to_ptr.vmem [resolvable:$true] %s49
      %55 = dma.hbm_to_vmem [thread:$0]  %s4, 32768, %s50, [#allocation7], 1024, 1024, 64
    $region21: #{tpu_custom_call.1} parent=1 // pred_fallthru
      _
    // Predicated region
    $region22: #{tpu_custom_call.1} parent=1 // pred_check
      _
    $region23: #{tpu_custom_call.1} parent=1 // pred_check_branch
      %57 = sbr.rel (0) target = $region25
    $region24: #{tpu_custom_call.1} parent=1 // pred_region
      _
    $region25: #{tpu_custom_call.1} parent=1 // pred_fallthru
      _
    // Predicated region
    $region26: #{tpu_custom_call.1} parent=1 // pred_check
      _
    $region27: #{tpu_custom_call.1} parent=1 // pred_check_branch
      %59 = sbr.rel (0) target = $region29
    $region28: #{tpu_custom_call.1} parent=1 // pred_region
      _
    $region29: #{tpu_custom_call.1} parent=1 // pred_fallthru
      _
    // Predicated region
    $region30: #{tpu_custom_call.1} parent=1 // pred_check
      _
    $region31: #{tpu_custom_call.1} parent=1 // pred_check_branch
      %61 = sbr.rel (0) target = $region33
    $region32: #{tpu_custom_call.1} parent=1 // pred_region
      %s63 = ssub.s32 1024, 1024
      %64 = vsyncadd [#allocation10], %s63
      %s66 = sshll.u32 [#allocation9], 4
      %s67 = int_to_ptr.vmem [resolvable:$true] %s66
      %69 = dma.hbm_to_vmem [thread:$0]  %s7, 1024, %s67, [#allocation10]
    $region33: #{tpu_custom_call.1} parent=1 // pred_fallthru
      _
    // Predicated region
    $region34: #{tpu_custom_call.1} parent=1 // pred_check
      _
    $region35: #{tpu_custom_call.1} parent=1 // pred_check_branch
      %71 = sbr.rel (0) target = $region37
    $region36: #{tpu_custom_call.1} parent=1 // pred_region
      %72 = dma.done [#allocation4], 512
    $region37: #{tpu_custom_call.1} parent=1 // pred_fallthru
      _
    // Predicated region
    $region38: #{tpu_custom_call.1} parent=1 // pred_check
      _
    $region39: #{tpu_custom_call.1} parent=1 // pred_check_branch
      %74 = sbr.rel (0) target = $region41
    $region40: #{tpu_custom_call.1} parent=1 // pred_region
      %75 = dma.done [#allocation7], 1024
    $region41: #{tpu_custom_call.1} parent=1 // pred_fallthru
      _
    // Predicated region
    $region42: #{tpu_custom_call.1} parent=1 // pred_check
      _
    $region43: #{tpu_custom_call.1} parent=1 // pred_check_branch
      %77 = sbr.rel (0) target = $region45
    $region44: #{tpu_custom_call.1} parent=1 // pred_region
      %78 = dma.done [#allocation7], 32768
    $region45: #{tpu_custom_call.1} parent=1 // pred_fallthru
      _
    // Predicated region
    $region46: #{tpu_custom_call.1} parent=1 // pred_check
      _
    $region47: #{tpu_custom_call.1} parent=1 // pred_check_branch
      %80 = sbr.rel (0) target = $region49
    $region48: #{tpu_custom_call.1} parent=1 // pred_region
      %81 = dma.done [#allocation10], 1024
    $region49: #{tpu_custom_call.1} parent=1 // pred_fallthru
      _
    %v82 = vld [vmem:[%s3] sm:$0xff]
    %v83 = vld [vmem:[#allocation3] sm:$0xff]
    %v84 = vld [vmem:[#allocation3 + $0x8] sm:$0xff]
    %v85 = vld [vmem:[#allocation3 + $0x10] sm:$0xff]
    %v86 = vld [vmem:[#allocation3 + $0x18] sm:$0xff]
    %vm87 = vcmask 130048
    %v89 = vsel %vm87, %v82, 0
    %91 = vmatprep.subr.mxu0 %v84
    %92 = vmatpush1.msra.mxu0 %v83
    %93 = vmatprep.subr.mxu0 %v86
    %94 = vmatpush1.msra.mxu0 %v85
    %95 = vmatprep.subr.mxu0 0.0
    %96 = vmatpush1.msra.mxu0 0.0
    %97 = vmatprep.subr.mxu0 0.0
    %98 = vmatpush1.msra.mxu0 0.0
    %99 = vmatprep.subr.mxu0 0.0
    %100 = vmatpush1.msra.mxu0 0.0
    %101 = vmatprep.subr.mxu0 0.0
    %102 = vmatpush1.msra.mxu0 0.0
    %103 = vmatprep.subr.mxu0 0.0
    %104 = vmatpush1.msra.mxu0 0.0
    %105 = vmatprep.subr.mxu0 0.0
    %106 = vmatpush1.msra.mxu0 0.0
    %107 = vmatprep.subr.mxu0 0.0
    %108 = vmatpush1.msra.mxu0 0.0
    %109 = vmatprep.subr.mxu0 0.0
    %110 = vmatpush1.msra.mxu0 0.0
    %111 = vmatprep.subr.mxu0 0.0
    %112 = vmatpush1.msra.mxu0 0.0
    %113 = vmatprep.subr.mxu0 0.0
    %114 = vmatpush1.msra.mxu0 0.0
    %115 = vmatprep.subr.mxu0 0.0
    %116 = vmatpush1.msra.mxu0 0.0
    %117 = vmatprep.subr.mxu0 0.0
    %118 = vmatpush1.msra.mxu0 0.0
    %119 = vmatprep.subr.mxu0 0.0
    %120 = vmatpush1.msra.mxu0 0.0
    %121 = vmatprep.subr.mxu0 0.0
    %122 = vmatpush1.msra.mxu0 0.0
    %123 = vmatprep.subr.mxu0 0.0
    %124 = vmatpush1.msra.mxu0 0.0
    %125 = vmatprep.subr.mxu0 0.0
    %126 = vmatpush1.msra.mxu0 0.0
    %127 = vmatprep.subr.mxu0 0.0
    %128 = vmatpush1.msra.mxu0 0.0
    %129 = vmatprep.subr.mxu0 0.0
    %130 = vmatpush1.msra.mxu0 0.0
    %131 = vmatprep.subr.mxu0 0.0
    %132 = vmatpush1.msra.mxu0 0.0
    %133 = vmatprep.subr.mxu0 0.0
    %134 = vmatpush1.msra.mxu0 0.0
    %135 = vmatprep.subr.mxu0 0.0
    %136 = vmatpush1.msra.mxu0 0.0
    %137 = vmatprep.subr.mxu0 0.0
    %138 = vmatpush1.msra.mxu0 0.0
    %139 = vmatprep.subr.mxu0 0.0
    %140 = vmatpush1.msra.mxu0 0.0
    %141 = vmatprep.subr.mxu0 0.0
    %142 = vmatpush1.msra.mxu0 0.0
    %143 = vmatprep.subr.mxu0 0.0
    %144 = vmatpush1.msra.mxu0 0.0
    %145 = vmatprep.subr.mxu0 0.0
    %146 = vmatpush1.msra.mxu0 0.0
    %147 = vmatprep.subr.mxu0 0.0
    %148 = vmatpush1.msra.mxu0 0.0
    %149 = vmatprep.subr.mxu0 0.0
    %150 = vmatpush1.msra.mxu0 0.0
    %151 = vmatprep.subr.mxu0 0.0
    %152 = vmatpush1.msra.mxu0 0.0
    %153 = vmatprep.subr.mxu0 0.0
    %154 = vmatpush1.msra.mxu0 0.0
    %155 = vmatprep.mubr.f32.mxu0 0.0
    %156 = vmatmul.mubr.f32.gmra.mrb[0].mxu0 %v89
    %v157 = vpop.f32.mrb[0].mxu0
    %v158 = vadd.f32 0.0, %v157
    %v159 = vpop.f32.mrb[0].mxu0
    %v160 = vadd.f32 0.0, %v159
    %161 = vdwg.mxu0
    %v162 = vld [vmem:[#allocation8] sm:$0xff]
    %v163 = vld [vmem:[#allocation8 + $0x8] sm:$0xff]
    %v164 = vld [vmem:[#allocation8 + $0x10] sm:$0xff]
    %v165 = vld [vmem:[#allocation8 + $0x18] sm:$0xff]
    %v166 = vld [vmem:[#allocation8 + $0x20] sm:$0xff]
    %v167 = vld [vmem:[#allocation8 + $0x28] sm:$0xff]
    %v168 = vld [vmem:[#allocation8 + $0x30] sm:$0xff]
    %v169 = vld [vmem:[#allocation8 + $0x38] sm:$0xff]
    %v170 = vld [vmem:[#allocation8 + $0x40] sm:$0xff]
    %v171 = vld [vmem:[#allocation8 + $0x48] sm:$0xff]
    %v172 = vld [vmem:[#allocation8 + $0x50] sm:$0xff]
    %v173 = vld [vmem:[#allocation8 + $0x58] sm:$0xff]
    %v174 = vld [vmem:[#allocation8 + $0x60] sm:$0xff]
    %v175 = vld [vmem:[#allocation8 + $0x68] sm:$0xff]
    %v176 = vld [vmem:[#allocation8 + $0x70] sm:$0xff]
    %v177 = vld [vmem:[#allocation8 + $0x78] sm:$0xff]
    %v178 = vld [vmem:[#allocation8 + $0x80] sm:$0xff]
    %v179 = vld [vmem:[#allocation8 + $0x88] sm:$0xff]
    %v180 = vld [vmem:[#allocation8 + $0x90] sm:$0xff]
    %v181 = vld [vmem:[#allocation8 + $0x98] sm:$0xff]
    %v182 = vld [vmem:[#allocation8 + $0xa0] sm:$0xff]
    %v183 = vld [vmem:[#allocation8 + $0xa8] sm:$0xff]
    %v184 = vld [vmem:[#allocation8 + $0xb0] sm:$0xff]
    %v185 = vld [vmem:[#allocation8 + $0xb8] sm:$0xff]
    %v186 = vld [vmem:[#allocation8 + $0xc0] sm:$0xff]
    %v187 = vld [vmem:[#allocation8 + $0xc8] sm:$0xff]
    %v188 = vld [vmem:[#allocation8 + $0xd0] sm:$0xff]
    %v189 = vld [vmem:[#allocation8 + $0xd8] sm:$0xff]
    %v190 = vld [vmem:[#allocation8 + $0xe0] sm:$0xff]
    %v191 = vld [vmem:[#allocation8 + $0xe8] sm:$0xff]
    %v192 = vld [vmem:[#allocation8 + $0xf0] sm:$0xff]
    %v193 = vld [vmem:[#allocation8 + $0xf8] sm:$0xff]
    %v194 = vld [vmem:[#allocation8 + $0x100] sm:$0xff]
    %v195 = vld [vmem:[#allocation8 + $0x108] sm:$0xff]
    %v196 = vld [vmem:[#allocation8 + $0x110] sm:$0xff]
    %v197 = vld [vmem:[#allocation8 + $0x118] sm:$0xff]
    %v198 = vld [vmem:[#allocation8 + $0x120] sm:$0xff]
    %v199 = vld [vmem:[#allocation8 + $0x128] sm:$0xff]
    %v200 = vld [vmem:[#allocation8 + $0x130] sm:$0xff]
    %v201 = vld [vmem:[#allocation8 + $0x138] sm:$0xff]
    %v202 = vld [vmem:[#allocation8 + $0x140] sm:$0xff]
    %v203 = vld [vmem:[#allocation8 + $0x148] sm:$0xff]
    %v204 = vld [vmem:[#allocation8 + $0x150] sm:$0xff]
    %v205 = vld [vmem:[#allocation8 + $0x158] sm:$0xff]
    %v206 = vld [vmem:[#allocation8 + $0x160] sm:$0xff]
    %v207 = vld [vmem:[#allocation8 + $0x168] sm:$0xff]
    %v208 = vld [vmem:[#allocation8 + $0x170] sm:$0xff]
    %v209 = vld [vmem:[#allocation8 + $0x178] sm:$0xff]
    %v210 = vld [vmem:[#allocation8 + $0x180] sm:$0xff]
    %v211 = vld [vmem:[#allocation8 + $0x188] sm:$0xff]
    %v212 = vld [vmem:[#allocation8 + $0x190] sm:$0xff]
    %v213 = vld [vmem:[#allocation8 + $0x198] sm:$0xff]
    %v214 = vld [vmem:[#allocation8 + $0x1a0] sm:$0xff]
    %v215 = vld [vmem:[#allocation8 + $0x1a8] sm:$0xff]
    %v216 = vld [vmem:[#allocation8 + $0x1b0] sm:$0xff]
    %v217 = vld [vmem:[#allocation8 + $0x1b8] sm:$0xff]
    %v218 = vld [vmem:[#allocation8 + $0x1c0] sm:$0xff]
    %v219 = vld [vmem:[#allocation8 + $0x1c8] sm:$0xff]
    %v220 = vld [vmem:[#allocation8 + $0x1d0] sm:$0xff]
    %v221 = vld [vmem:[#allocation8 + $0x1d8] sm:$0xff]
    %v222 = vld [vmem:[#allocation8 + $0x1e0] sm:$0xff]
    %v223 = vld [vmem:[#allocation8 + $0x1e8] sm:$0xff]
    %v224 = vld [vmem:[#allocation8 + $0x1f0] sm:$0xff]
    %v225 = vld [vmem:[#allocation8 + $0x1f8] sm:$0xff]
    %v226 = vld [vmem:[#allocation8 + $0x200] sm:$0xff]
    %v227 = vld [vmem:[#allocation8 + $0x208] sm:$0xff]
    %v228 = vld [vmem:[#allocation8 + $0x210] sm:$0xff]
    %v229 = vld [vmem:[#allocation8 + $0x218] sm:$0xff]
    %v230 = vld [vmem:[#allocation8 + $0x220] sm:$0xff]
    %v231 = vld [vmem:[#allocation8 + $0x228] sm:$0xff]
    %v232 = vld [vmem:[#allocation8 + $0x230] sm:$0xff]
    %v233 = vld [vmem:[#allocation8 + $0x238] sm:$0xff]
    %v234 = vld [vmem:[#allocation8 + $0x240] sm:$0xff]
    %v235 = vld [vmem:[#allocation8 + $0x248] sm:$0xff]
    %v236 = vld [vmem:[#allocation8 + $0x250] sm:$0xff]
    %v237 = vld [vmem:[#allocation8 + $0x258] sm:$0xff]
    %v238 = vld [vmem:[#allocation8 + $0x260] sm:$0xff]
    %v239 = vld [vmem:[#allocation8 + $0x268] sm:$0xff]
    %v240 = vld [vmem:[#allocation8 + $0x270] sm:$0xff]
    %v241 = vld [vmem:[#allocation8 + $0x278] sm:$0xff]
    %v242 = vld [vmem:[#allocation8 + $0x280] sm:$0xff]
    %v243 = vld [vmem:[#allocation8 + $0x288] sm:$0xff]
    %v244 = vld [vmem:[#allocation8 + $0x290] sm:$0xff]
    %v245 = vld [vmem:[#allocation8 + $0x298] sm:$0xff]
    %v246 = vld [vmem:[#allocation8 + $0x2a0] sm:$0xff]
    %v247 = vld [vmem:[#allocation8 + $0x2a8] sm:$0xff]
    %v248 = vld [vmem:[#allocation8 + $0x2b0] sm:$0xff]
    %v249 = vld [vmem:[#allocation8 + $0x2b8] sm:$0xff]
    %v250 = vld [vmem:[#allocation8 + $0x2c0] sm:$0xff]
    %v251 = vld [vmem:[#allocation8 + $0x2c8] sm:$0xff]
    %v252 = vld [vmem:[#allocation8 + $0x2d0] sm:$0xff]
    %v253 = vld [vmem:[#allocation8 + $0x2d8] sm:$0xff]
    %v254 = vld [vmem:[#allocation8 + $0x2e0] sm:$0xff]
    %v255 = vld [vmem:[#allocation8 + $0x2e8] sm:$0xff]
    %v256 = vld [vmem:[#allocation8 + $0x2f0] sm:$0xff]
    %v257 = vld [vmem:[#allocation8 + $0x2f8] sm:$0xff]
    %v258 = vld [vmem:[#allocation8 + $0x300] sm:$0xff]
    %v259 = vld [vmem:[#allocation8 + $0x308] sm:$0xff]
    %v260 = vld [vmem:[#allocation8 + $0x310] sm:$0xff]
    %v261 = vld [vmem:[#allocation8 + $0x318] sm:$0xff]
    %v262 = vld [vmem:[#allocation8 + $0x320] sm:$0xff]
    %v263 = vld [vmem:[#allocation8 + $0x328] sm:$0xff]
    %v264 = vld [vmem:[#allocation8 + $0x330] sm:$0xff]
    %v265 = vld [vmem:[#allocation8 + $0x338] sm:$0xff]
    %v266 = vld [vmem:[#allocation8 + $0x340] sm:$0xff]
    %v267 = vld [vmem:[#allocation8 + $0x348] sm:$0xff]
    %v268 = vld [vmem:[#allocation8 + $0x350] sm:$0xff]
    %v269 = vld [vmem:[#allocation8 + $0x358] sm:$0xff]
    %v270 = vld [vmem:[#allocation8 + $0x360] sm:$0xff]
    %v271 = vld [vmem:[#allocation8 + $0x368] sm:$0xff]
    %v272 = vld [vmem:[#allocation8 + $0x370] sm:$0xff]
    %v273 = vld [vmem:[#allocation8 + $0x378] sm:$0xff]
    %v274 = vld [vmem:[#allocation8 + $0x380] sm:$0xff]
    %v275 = vld [vmem:[#allocation8 + $0x388] sm:$0xff]
    %v276 = vld [vmem:[#allocation8 + $0x390] sm:$0xff]
    %v277 = vld [vmem:[#allocation8 + $0x398] sm:$0xff]
    %v278 = vld [vmem:[#allocation8 + $0x3a0] sm:$0xff]
    %v279 = vld [vmem:[#allocation8 + $0x3a8] sm:$0xff]
    %v280 = vld [vmem:[#allocation8 + $0x3b0] sm:$0xff]
    %v281 = vld [vmem:[#allocation8 + $0x3b8] sm:$0xff]
    %v282 = vld [vmem:[#allocation8 + $0x3c0] sm:$0xff]
    %v283 = vld [vmem:[#allocation8 + $0x3c8] sm:$0xff]
    %v284 = vld [vmem:[#allocation8 + $0x3d0] sm:$0xff]
    %v285 = vld [vmem:[#allocation8 + $0x3d8] sm:$0xff]
    %v286 = vld [vmem:[#allocation8 + $0x3e0] sm:$0xff]
    %v287 = vld [vmem:[#allocation8 + $0x3e8] sm:$0xff]
    %v288 = vld [vmem:[#allocation8 + $0x3f0] sm:$0xff]
    %v289 = vld [vmem:[#allocation8 + $0x3f8] sm:$0xff]
    %v290 = vld [vmem:[#allocation8 + $0x400] sm:$0xff]
    %v291 = vld [vmem:[#allocation8 + $0x408] sm:$0xff]
    %v292 = vld [vmem:[#allocation8 + $0x410] sm:$0xff]
    %v293 = vld [vmem:[#allocation8 + $0x418] sm:$0xff]
    %v294 = vld [vmem:[#allocation8 + $0x420] sm:$0xff]
    %v295 = vld [vmem:[#allocation8 + $0x428] sm:$0xff]
    %v296 = vld [vmem:[#allocation8 + $0x430] sm:$0xff]
    %v297 = vld [vmem:[#allocation8 + $0x438] sm:$0xff]
    %v298 = vld [vmem:[#allocation8 + $0x440] sm:$0xff]
    %v299 = vld [vmem:[#allocation8 + $0x448] sm:$0xff]
    %v300 = vld [vmem:[#allocation8 + $0x450] sm:$0xff]
    %v301 = vld [vmem:[#allocation8 + $0x458] sm:$0xff]
    %v302 = vld [vmem:[#allocation8 + $0x460] sm:$0xff]
    %v303 = vld [vmem:[#allocation8 + $0x468] sm:$0xff]
    %v304 = vld [vmem:[#allocation8 + $0x470] sm:$0xff]
    %v305 = vld [vmem:[#allocation8 + $0x478] sm:$0xff]
    %v306 = vld [vmem:[#allocation8 + $0x480] sm:$0xff]
    %v307 = vld [vmem:[#allocation8 + $0x488] sm:$0xff]
    %v308 = vld [vmem:[#allocation8 + $0x490] sm:$0xff]
    %v309 = vld [vmem:[#allocation8 + $0x498] sm:$0xff]
    %v310 = vld [vmem:[#allocation8 + $0x4a0] sm:$0xff]
    %v311 = vld [vmem:[#allocation8 + $0x4a8] sm:$0xff]
    %v312 = vld [vmem:[#allocation8 + $0x4b0] sm:$0xff]
    %v313 = vld [vmem:[#allocation8 + $0x4b8] sm:$0xff]
    %v314 = vld [vmem:[#allocation8 + $0x4c0] sm:$0xff]
    %v315 = vld [vmem:[#allocation8 + $0x4c8] sm:$0xff]
    %v316 = vld [vmem:[#allocation8 + $0x4d0] sm:$0xff]
    %v317 = vld [vmem:[#allocation8 + $0x4d8] sm:$0xff]
    %v318 = vld [vmem:[#allocation8 + $0x4e0] sm:$0xff]
    %v319 = vld [vmem:[#allocation8 + $0x4e8] sm:$0xff]
    %v320 = vld [vmem:[#allocation8 + $0x4f0] sm:$0xff]
    %v321 = vld [vmem:[#allocation8 + $0x4f8] sm:$0xff]
    %v322 = vld [vmem:[#allocation8 + $0x500] sm:$0xff]
    %v323 = vld [vmem:[#allocation8 + $0x508] sm:$0xff]
    %v324 = vld [vmem:[#allocation8 + $0x510] sm:$0xff]
    %v325 = vld [vmem:[#allocation8 + $0x518] sm:$0xff]
    %v326 = vld [vmem:[#allocation8 + $0x520] sm:$0xff]
    %v327 = vld [vmem:[#allocation8 + $0x528] sm:$0xff]
    %v328 = vld [vmem:[#allocation8 + $0x530] sm:$0xff]
    %v329 = vld [vmem:[#allocation8 + $0x538] sm:$0xff]
    %v330 = vld [vmem:[#allocation8 + $0x540] sm:$0xff]
    %v331 = vld [vmem:[#allocation8 + $0x548] sm:$0xff]
    %v332 = vld [vmem:[#allocation8 + $0x550] sm:$0xff]
    %v333 = vld [vmem:[#allocation8 + $0x558] sm:$0xff]
    %v334 = vld [vmem:[#allocation8 + $0x560] sm:$0xff]
    %v335 = vld [vmem:[#allocation8 + $0x568] sm:$0xff]
    %v336 = vld [vmem:[#allocation8 + $0x570] sm:$0xff]
    %v337 = vld [vmem:[#allocation8 + $0x578] sm:$0xff]
    %v338 = vld [vmem:[#allocation8 + $0x580] sm:$0xff]
    %v339 = vld [vmem:[#allocation8 + $0x588] sm:$0xff]
    %v340 = vld [vmem:[#allocation8 + $0x590] sm:$0xff]
    %v341 = vld [vmem:[#allocation8 + $0x598] sm:$0xff]
    %v342 = vld [vmem:[#allocation8 + $0x5a0] sm:$0xff]
    %v343 = vld [vmem:[#allocation8 + $0x5a8] sm:$0xff]
    %v344 = vld [vmem:[#allocation8 + $0x5b0] sm:$0xff]
    %v345 = vld [vmem:[#allocation8 + $0x5b8] sm:$0xff]
    %v346 = vld [vmem:[#allocation8 + $0x5c0] sm:$0xff]
    %v347 = vld [vmem:[#allocation8 + $0x5c8] sm:$0xff]
    %v348 = vld [vmem:[#allocation8 + $0x5d0] sm:$0xff]
    %v349 = vld [vmem:[#allocation8 + $0x5d8] sm:$0xff]
    %v350 = vld [vmem:[#allocation8 + $0x5e0] sm:$0xff]
    %v351 = vld [vmem:[#allocation8 + $0x5e8] sm:$0xff]
    %v352 = vld [vmem:[#allocation8 + $0x5f0] sm:$0xff]
    %v353 = vld [vmem:[#allocation8 + $0x5f8] sm:$0xff]
    %v354 = vld [vmem:[#allocation8 + $0x600] sm:$0xff]
    %v355 = vld [vmem:[#allocation8 + $0x608] sm:$0xff]
    %v356 = vld [vmem:[#allocation8 + $0x610] sm:$0xff]
    %v357 = vld [vmem:[#allocation8 + $0x618] sm:$0xff]
    %v358 = vld [vmem:[#allocation8 + $0x620] sm:$0xff]
    %v359 = vld [vmem:[#allocation8 + $0x628] sm:$0xff]
    %v360 = vld [vmem:[#allocation8 + $0x630] sm:$0xff]
    %v361 = vld [vmem:[#allocation8 + $0x638] sm:$0xff]
    %v362 = vld [vmem:[#allocation8 + $0x640] sm:$0xff]
    %v363 = vld [vmem:[#allocation8 + $0x648] sm:$0xff]
    %v364 = vld [vmem:[#allocation8 + $0x650] sm:$0xff]
    %v365 = vld [vmem:[#allocation8 + $0x658] sm:$0xff]
    %v366 = vld [vmem:[#allocation8 + $0x660] sm:$0xff]
    %v367 = vld [vmem:[#allocation8 + $0x668] sm:$0xff]
    %v368 = vld [vmem:[#allocation8 + $0x670] sm:$0xff]
    %v369 = vld [vmem:[#allocation8 + $0x678] sm:$0xff]
    %v370 = vld [vmem:[#allocation8 + $0x680] sm:$0xff]
    %v371 = vld [vmem:[#allocation8 + $0x688] sm:$0xff]
    %v372 = vld [vmem:[#allocation8 + $0x690] sm:$0xff]
    %v373 = vld [vmem:[#allocation8 + $0x698] sm:$0xff]
    %v374 = vld [vmem:[#allocation8 + $0x6a0] sm:$0xff]
    %v375 = vld [vmem:[#allocation8 + $0x6a8] sm:$0xff]
    %v376 = vld [vmem:[#allocation8 + $0x6b0] sm:$0xff]
    %v377 = vld [vmem:[#allocation8 + $0x6b8] sm:$0xff]
    %v378 = vld [vmem:[#allocation8 + $0x6c0] sm:$0xff]
    %v379 = vld [vmem:[#allocation8 + $0x6c8] sm:$0xff]
    %v380 = vld [vmem:[#allocation8 + $0x6d0] sm:$0xff]
    %v381 = vld [vmem:[#allocation8 + $0x6d8] sm:$0xff]
    %v382 = vld [vmem:[#allocation8 + $0x6e0] sm:$0xff]
    %v383 = vld [vmem:[#allocation8 + $0x6e8] sm:$0xff]
    %v384 = vld [vmem:[#allocation8 + $0x6f0] sm:$0xff]
    %v385 = vld [vmem:[#allocation8 + $0x6f8] sm:$0xff]
    %v386 = vld [vmem:[#allocation8 + $0x700] sm:$0xff]
    %v387 = vld [vmem:[#allocation8 + $0x708] sm:$0xff]
    %v388 = vld [vmem:[#allocation8 + $0x710] sm:$0xff]
    %v389 = vld [vmem:[#allocation8 + $0x718] sm:$0xff]
    %v390 = vld [vmem:[#allocation8 + $0x720] sm:$0xff]
    %v391 = vld [vmem:[#allocation8 + $0x728] sm:$0xff]
    %v392 = vld [vmem:[#allocation8 + $0x730] sm:$0xff]
    %v393 = vld [vmem:[#allocation8 + $0x738] sm:$0xff]
    %v394 = vld [vmem:[#allocation8 + $0x740] sm:$0xff]
    %v395 = vld [vmem:[#allocation8 + $0x748] sm:$0xff]
    %v396 = vld [vmem:[#allocation8 + $0x750] sm:$0xff]
    %v397 = vld [vmem:[#allocation8 + $0x758] sm:$0xff]
    %v398 = vld [vmem:[#allocation8 + $0x760] sm:$0xff]
    %v399 = vld [vmem:[#allocation8 + $0x768] sm:$0xff]
    %v400 = vld [vmem:[#allocation8 + $0x770] sm:$0xff]
    %v401 = vld [vmem:[#allocation8 + $0x778] sm:$0xff]
    %v402 = vld [vmem:[#allocation8 + $0x780] sm:$0xff]
    %v403 = vld [vmem:[#allocation8 + $0x788] sm:$0xff]
    %v404 = vld [vmem:[#allocation8 + $0x790] sm:$0xff]
    %v405 = vld [vmem:[#allocation8 + $0x798] sm:$0xff]
    %v406 = vld [vmem:[#allocation8 + $0x7a0] sm:$0xff]
    %v407 = vld [vmem:[#allocation8 + $0x7a8] sm:$0xff]
    %v408 = vld [vmem:[#allocation8 + $0x7b0] sm:$0xff]
    %v409 = vld [vmem:[#allocation8 + $0x7b8] sm:$0xff]
    %v410 = vld [vmem:[#allocation8 + $0x7c0] sm:$0xff]
    %v411 = vld [vmem:[#allocation8 + $0x7c8] sm:$0xff]
    %v412 = vld [vmem:[#allocation8 + $0x7d0] sm:$0xff]
    %v413 = vld [vmem:[#allocation8 + $0x7d8] sm:$0xff]
    %v414 = vld [vmem:[#allocation8 + $0x7e0] sm:$0xff]
    %v415 = vld [vmem:[#allocation8 + $0x7e8] sm:$0xff]
    %v416 = vld [vmem:[#allocation8 + $0x7f0] sm:$0xff]
    %v417 = vld [vmem:[#allocation8 + $0x7f8] sm:$0xff]
    %418 = vmatprep.subr.mxu0 %v163
    %419 = vmatpush1.msra.mxu0 %v162
    %420 = vmatprep.subr.mxu0 %v171
    %421 = vmatpush1.msra.mxu0 %v170
    %422 = vmatprep.subr.mxu0 %v179
    %423 = vmatpush1.msra.mxu0 %v178
    %424 = vmatprep.subr.mxu0 %v187
    %425 = vmatpush1.msra.mxu0 %v186
    %426 = vmatprep.subr.mxu0 %v195
    %427 = vmatpush1.msra.mxu0 %v194
    %428 = vmatprep.subr.mxu0 %v203
    %429 = vmatpush1.msra.mxu0 %v202
    %430 = vmatprep.subr.mxu0 %v211
    %431 = vmatpush1.msra.mxu0 %v210
    %432 = vmatprep.subr.mxu0 %v219
    %433 = vmatpush1.msra.mxu0 %v218
    %434 = vmatprep.subr.mxu0 %v227
    %435 = vmatpush1.msra.mxu0 %v226
    %436 = vmatprep.subr.mxu0 %v235
    %437 = vmatpush1.msra.mxu0 %v234
    %438 = vmatprep.subr.mxu0 %v243
    %439 = vmatpush1.msra.mxu0 %v242
    %440 = vmatprep.subr.mxu0 %v251
    %441 = vmatpush1.msra.mxu0 %v250
    %442 = vmatprep.subr.mxu0 %v259
    %443 = vmatpush1.msra.mxu0 %v258
    %444 = vmatprep.subr.mxu0 %v267
    %445 = vmatpush1.msra.mxu0 %v266
    %446 = vmatprep.subr.mxu0 %v275
    %447 = vmatpush1.msra.mxu0 %v274
    %448 = vmatprep.subr.mxu0 %v283
    %449 = vmatpush1.msra.mxu0 %v282
    %450 = vmatprep.subr.mxu0 %v291
    %451 = vmatpush1.msra.mxu0 %v290
    %452 = vmatprep.subr.mxu0 %v299
    %453 = vmatpush1.msra.mxu0 %v298
    %454 = vmatprep.subr.mxu0 %v307
    %455 = vmatpush1.msra.mxu0 %v306
    %456 = vmatprep.subr.mxu0 %v315
    %457 = vmatpush1.msra.mxu0 %v314
    %458 = vmatprep.subr.mxu0 %v323
    %459 = vmatpush1.msra.mxu0 %v322
    %460 = vmatprep.subr.mxu0 %v331
    %461 = vmatpush1.msra.mxu0 %v330
    %462 = vmatprep.subr.mxu0 %v339
    %463 = vmatpush1.msra.mxu0 %v338
    %464 = vmatprep.subr.mxu0 %v347
    %465 = vmatpush1.msra.mxu0 %v346
    %466 = vmatprep.subr.mxu0 %v355
    %467 = vmatpush1.msra.mxu0 %v354
    %468 = vmatprep.subr.mxu0 %v363
    %469 = vmatpush1.msra.mxu0 %v362
    %470 = vmatprep.subr.mxu0 %v371
    %471 = vmatpush1.msra.mxu0 %v370
    %472 = vmatprep.subr.mxu0 %v379
    %473 = vmatpush1.msra.mxu0 %v378
    %474 = vmatprep.subr.mxu0 %v387
    %475 = vmatpush1.msra.mxu0 %v386
    %476 = vmatprep.subr.mxu0 %v395
    %477 = vmatpush1.msra.mxu0 %v394
    %478 = vmatprep.subr.mxu0 %v403
    %479 = vmatpush1.msra.mxu0 %v402
    %480 = vmatprep.subr.mxu0 %v411
    %481 = vmatpush1.msra.mxu0 %v410
    %482 = vmatprep.mubr.f32.mxu0 %v160
    %483 = vmatmul.mubr.f32.gmra.mrb[0].mxu0 %v158
    %v484 = vpop.f32.mrb[0].mxu0
    %v485 = vadd.f32 0.0, %v484
    %v486 = vpop.f32.mrb[0].mxu0
    %v487 = vadd.f32 0.0, %v486
    %488 = vdwg.mxu0
    %489 = vmatprep.subr.mxu0 %v165
    %490 = vmatpush1.msra.mxu0 %v164
    %491 = vmatprep.subr.mxu0 %v173
    %492 = vmatpush1.msra.mxu0 %v172
    %493 = vmatprep.subr.mxu0 %v181
    %494 = vmatpush1.msra.mxu0 %v180
    %495 = vmatprep.subr.mxu0 %v189
    %496 = vmatpush1.msra.mxu0 %v188
    %497 = vmatprep.subr.mxu0 %v197
    %498 = vmatpush1.msra.mxu0 %v196
    %499 = vmatprep.subr.mxu0 %v205
    %500 = vmatpush1.msra.mxu0 %v204
    %501 = vmatprep.subr.mxu0 %v213
    %502 = vmatpush1.msra.mxu0 %v212
    %503 = vmatprep.subr.mxu0 %v221
    %504 = vmatpush1.msra.mxu0 %v220
    %505 = vmatprep.subr.mxu0 %v229
    %506 = vmatpush1.msra.mxu0 %v228
    %507 = vmatprep.subr.mxu0 %v237
    %508 = vmatpush1.msra.mxu0 %v236
    %509 = vmatprep.subr.mxu0 %v245
    %510 = vmatpush1.msra.mxu0 %v244
    %511 = vmatprep.subr.mxu0 %v253
    %512 = vmatpush1.msra.mxu0 %v252
    %513 = vmatprep.subr.mxu0 %v261
    %514 = vmatpush1.msra.mxu0 %v260
    %515 = vmatprep.subr.mxu0 %v269
    %516 = vmatpush1.msra.mxu0 %v268
    %517 = vmatprep.subr.mxu0 %v277
    %518 = vmatpush1.msra.mxu0 %v276
    %519 = vmatprep.subr.mxu0 %v285
    %520 = vmatpush1.msra.mxu0 %v284
    %521 = vmatprep.subr.mxu0 %v293
    %522 = vmatpush1.msra.mxu0 %v292
    %523 = vmatprep.subr.mxu0 %v301
    %524 = vmatpush1.msra.mxu0 %v300
    %525 = vmatprep.subr.mxu0 %v309
    %526 = vmatpush1.msra.mxu0 %v308
    %527 = vmatprep.subr.mxu0 %v317
    %528 = vmatpush1.msra.mxu0 %v316
    %529 = vmatprep.subr.mxu0 %v325
    %530 = vmatpush1.msra.mxu0 %v324
    %531 = vmatprep.subr.mxu0 %v333
    %532 = vmatpush1.msra.mxu0 %v332
    %533 = vmatprep.subr.mxu0 %v341
    %534 = vmatpush1.msra.mxu0 %v340
    %535 = vmatprep.subr.mxu0 %v349
    %536 = vmatpush1.msra.mxu0 %v348
    %537 = vmatprep.subr.mxu0 %v357
    %538 = vmatpush1.msra.mxu0 %v356
    %539 = vmatprep.subr.mxu0 %v365
    %540 = vmatpush1.msra.mxu0 %v364
    %541 = vmatprep.subr.mxu0 %v373
    %542 = vmatpush1.msra.mxu0 %v372
    %543 = vmatprep.subr.mxu0 %v381
    %544 = vmatpush1.msra.mxu0 %v380
    %545 = vmatprep.subr.mxu0 %v389
    %546 = vmatpush1.msra.mxu0 %v388
    %547 = vmatprep.subr.mxu0 %v397
    %548 = vmatpush1.msra.mxu0 %v396
    %549 = vmatprep.subr.mxu0 %v405
    %550 = vmatpush1.msra.mxu0 %v404
    %551 = vmatprep.subr.mxu0 %v413
    %552 = vmatpush1.msra.mxu0 %v412
    %553 = vmatprep.mubr.f32.mxu0 %v160
    %554 = vmatmul.mubr.f32.gmra.mrb[0].mxu0 %v158
    %v555 = vpop.f32.mrb[0].mxu0
    %v556 = vadd.f32 0.0, %v555
    %v557 = vpop.f32.mrb[0].mxu0
    %v558 = vadd.f32 0.0, %v557
    %559 = vdwg.mxu0
    %560 = vmatprep.subr.mxu0 %v167
    %561 = vmatpush1.msra.mxu0 %v166
    %562 = vmatprep.subr.mxu0 %v175
    %563 = vmatpush1.msra.mxu0 %v174
    %564 = vmatprep.subr.mxu0 %v183
    %565 = vmatpush1.msra.mxu0 %v182
    %566 = vmatprep.subr.mxu0 %v191
    %567 = vmatpush1.msra.mxu0 %v190
    %568 = vmatprep.subr.mxu0 %v199
    %569 = vmatpush1.msra.mxu0 %v198
    %570 = vmatprep.subr.mxu0 %v207
    %571 = vmatpush1.msra.mxu0 %v206
    %572 = vmatprep.subr.mxu0 %v215
    %573 = vmatpush1.msra.mxu0 %v214
    %574 = vmatprep.subr.mxu0 %v223
    %575 = vmatpush1.msra.mxu0 %v222
    %576 = vmatprep.subr.mxu0 %v231
    %577 = vmatpush1.msra.mxu0 %v230
    %578 = vmatprep.subr.mxu0 %v239
    %579 = vmatpush1.msra.mxu0 %v238
    %580 = vmatprep.subr.mxu0 %v247
    %581 = vmatpush1.msra.mxu0 %v246
    %582 = vmatprep.subr.mxu0 %v255
    %583 = vmatpush1.msra.mxu0 %v254
    %584 = vmatprep.subr.mxu0 %v263
    %585 = vmatpush1.msra.mxu0 %v262
    %586 = vmatprep.subr.mxu0 %v271
    %587 = vmatpush1.msra.mxu0 %v270
    %588 = vmatprep.subr.mxu0 %v279
    %589 = vmatpush1.msra.mxu0 %v278
    %590 = vmatprep.subr.mxu0 %v287
    %591 = vmatpush1.msra.mxu0 %v286
    %592 = vmatprep.subr.mxu0 %v295
    %593 = vmatpush1.msra.mxu0 %v294
    %594 = vmatprep.subr.mxu0 %v303
    %595 = vmatpush1.msra.mxu0 %v302
    %596 = vmatprep.subr.mxu0 %v311
    %597 = vmatpush1.msra.mxu0 %v310
    %598 = vmatprep.subr.mxu0 %v319
    %599 = vmatpush1.msra.mxu0 %v318
    %600 = vmatprep.subr.mxu0 %v327
    %601 = vmatpush1.msra.mxu0 %v326
    %602 = vmatprep.subr.mxu0 %v335
    %603 = vmatpush1.msra.mxu0 %v334
    %604 = vmatprep.subr.mxu0 %v343
    %605 = vmatpush1.msra.mxu0 %v342
    %606 = vmatprep.subr.mxu0 %v351
    %607 = vmatpush1.msra.mxu0 %v350
    %608 = vmatprep.subr.mxu0 %v359
    %609 = vmatpush1.msra.mxu0 %v358
    %610 = vmatprep.subr.mxu0 %v367
    %611 = vmatpush1.msra.mxu0 %v366
    %612 = vmatprep.subr.mxu0 %v375
    %613 = vmatpush1.msra.mxu0 %v374
    %614 = vmatprep.subr.mxu0 %v383
    %615 = vmatpush1.msra.mxu0 %v382
    %616 = vmatprep.subr.mxu0 %v391
    %617 = vmatpush1.msra.mxu0 %v390
    %618 = vmatprep.subr.mxu0 %v399
    %619 = vmatpush1.msra.mxu0 %v398
    %620 = vmatprep.subr.mxu0 %v407
    %621 = vmatpush1.msra.mxu0 %v406
    %622 = vmatprep.subr.mxu0 %v415
    %623 = vmatpush1.msra.mxu0 %v414
    %624 = vmatprep.mubr.f32.mxu0 %v160
    %625 = vmatmul.mubr.f32.gmra.mrb[0].mxu0 %v158
    %v626 = vpop.f32.mrb[0].mxu0
    %v627 = vadd.f32 0.0, %v626
    %v628 = vpop.f32.mrb[0].mxu0
    %v629 = vadd.f32 0.0, %v628
    %630 = vdwg.mxu0
    %631 = vmatprep.subr.mxu0 %v169
    %632 = vmatpush1.msra.mxu0 %v168
    %633 = vmatprep.subr.mxu0 %v177
    %634 = vmatpush1.msra.mxu0 %v176
    %635 = vmatprep.subr.mxu0 %v185
    %636 = vmatpush1.msra.mxu0 %v184
    %637 = vmatprep.subr.mxu0 %v193
    %638 = vmatpush1.msra.mxu0 %v192
    %639 = vmatprep.subr.mxu0 %v201
    %640 = vmatpush1.msra.mxu0 %v200
    %641 = vmatprep.subr.mxu0 %v209
    %642 = vmatpush1.msra.mxu0 %v208
    %643 = vmatprep.subr.mxu0 %v217
    %644 = vmatpush1.msra.mxu0 %v216
    %645 = vmatprep.subr.mxu0 %v225
    %646 = vmatpush1.msra.mxu0 %v224
    %647 = vmatprep.subr.mxu0 %v233
    %648 = vmatpush1.msra.mxu0 %v232
    %649 = vmatprep.subr.mxu0 %v241
    %650 = vmatpush1.msra.mxu0 %v240
    %651 = vmatprep.subr.mxu0 %v249
    %652 = vmatpush1.msra.mxu0 %v248
    %653 = vmatprep.subr.mxu0 %v257
    %654 = vmatpush1.msra.mxu0 %v256
    %655 = vmatprep.subr.mxu0 %v265
    %656 = vmatpush1.msra.mxu0 %v264
    %657 = vmatprep.subr.mxu0 %v273
    %658 = vmatpush1.msra.mxu0 %v272
    %659 = vmatprep.subr.mxu0 %v281
    %660 = vmatpush1.msra.mxu0 %v280
    %661 = vmatprep.subr.mxu0 %v289
    %662 = vmatpush1.msra.mxu0 %v288
    %663 = vmatprep.subr.mxu0 %v297
    %664 = vmatpush1.msra.mxu0 %v296
    %665 = vmatprep.subr.mxu0 %v305
    %666 = vmatpush1.msra.mxu0 %v304
    %667 = vmatprep.subr.mxu0 %v313
    %668 = vmatpush1.msra.mxu0 %v312
    %669 = vmatprep.subr.mxu0 %v321
    %670 = vmatpush1.msra.mxu0 %v320
    %671 = vmatprep.subr.mxu0 %v329
    %672 = vmatpush1.msra.mxu0 %v328
    %673 = vmatprep.subr.mxu0 %v337
    %674 = vmatpush1.msra.mxu0 %v336
    %675 = vmatprep.subr.mxu0 %v345
    %676 = vmatpush1.msra.mxu0 %v344
    %677 = vmatprep.subr.mxu0 %v353
    %678 = vmatpush1.msra.mxu0 %v352
    %679 = vmatprep.subr.mxu0 %v361
    %680 = vmatpush1.msra.mxu0 %v360
    %681 = vmatprep.subr.mxu0 %v369
    %682 = vmatpush1.msra.mxu0 %v368
    %683 = vmatprep.subr.mxu0 %v377
    %684 = vmatpush1.msra.mxu0 %v376
    %685 = vmatprep.subr.mxu0 %v385
    %686 = vmatpush1.msra.mxu0 %v384
    %687 = vmatprep.subr.mxu0 %v393
    %688 = vmatpush1.msra.mxu0 %v392
    %689 = vmatprep.subr.mxu0 %v401
    %690 = vmatpush1.msra.mxu0 %v400
    %691 = vmatprep.subr.mxu0 %v409
    %692 = vmatpush1.msra.mxu0 %v408
    %693 = vmatprep.subr.mxu0 %v417
    %694 = vmatpush1.msra.mxu0 %v416
    %695 = vmatprep.mubr.f32.mxu0 %v160
    %696 = vmatmul.mubr.f32.gmra.mrb[0].mxu0 %v158
    %v697 = vpop.f32.mrb[0].mxu0
    %v698 = vadd.f32 0.0, %v697
    %v699 = vpop.f32.mrb[0].mxu0
    %v700 = vadd.f32 0.0, %v699
    %701 = vdwg.mxu0
    %s702 = sld [smem:[#allocation2]]
    %v703 = vld [vmem:[#allocation6] sm:$0xff]
    %v704 = vld [vmem:[#allocation6 + $0x8] sm:$0xff]
    %v705 = vld [vmem:[#allocation6 + $0x10] sm:$0xff]
    %v706 = vld [vmem:[#allocation6 + $0x18] sm:$0xff]
    %v707 = vld [vmem:[#allocation6 + $0x20] sm:$0xff]
    %v708 = vld [vmem:[#allocation6 + $0x28] sm:$0xff]
    %v709 = vld [vmem:[#allocation6 + $0x30] sm:$0xff]
    %v710 = vld [vmem:[#allocation6 + $0x38] sm:$0xff]
    %v711 = vstv %s702
    %v712 = vmul.f32 %v711, %v703
    %v713 = vmul.f32 %v711, %v704
    %v714 = vmul.f32 %v711, %v705
    %v715 = vmul.f32 %v711, %v706
    %v716 = vmul.f32 %v711, %v707
    %v717 = vmul.f32 %v711, %v708
    %v718 = vmul.f32 %v711, %v709
    %v719 = vmul.f32 %v711, %v710
    %v720 = vadd.f32 %v712, %v485
    %v721 = vadd.f32 %v713, %v487
    %v722 = vadd.f32 %v714, %v556
    %v723 = vadd.f32 %v715, %v558
    %v724 = vadd.f32 %v716, %v627
    %v725 = vadd.f32 %v717, %v629
    %v726 = vadd.f32 %v718, %v698
    %v727 = vadd.f32 %v719, %v700
    %728 = vrot.lane.b32.xlu0 %v720, 33
    %v729 = vpop.permute.xlu0 %728
    %730 = vrot.lane.b32.xlu0 %v721, 33
    %v731 = vpop.permute.xlu0 %730
    %732 = vrot.lane.b32.xlu0 %v722, 33
    %v733 = vpop.permute.xlu0 %732
    %734 = vrot.lane.b32.xlu0 %v723, 33
    %v735 = vpop.permute.xlu0 %734
    %736 = vrot.lane.b32.xlu0 %v724, 33
    %v737 = vpop.permute.xlu0 %736
    %738 = vrot.lane.b32.xlu0 %v725, 33
    %v739 = vpop.permute.xlu0 %738
    %740 = vrot.lane.b32.xlu0 %v726, 33
    %v741 = vpop.permute.xlu0 %740
    %742 = vrot.lane.b32.xlu0 %v727, 33
    %v743 = vpop.permute.xlu0 %742
    %v744 = vlaneseq
    %v745 = vand.u32 %v744, 127
    %vm746 = vcmp.lt.s32.totalorder %v745, 33
    %v747 = vsel %vm746, %v741, %v743
    %v748 = vsel %vm746, %v739, %v741
    %v749 = vsel %vm746, %v737, %v739
    %v750 = vsel %vm746, %v735, %v737
    %v751 = vsel %vm746, %v733, %v735
    %v752 = vsel %vm746, %v731, %v733
    %v753 = vsel %vm746, %v729, %v731
    %v754 = vsel %vm746, %v743, %v729
    %v755 = vld [vmem:[#allocation9] ss:$8 sm:$0xf]
    %v756 = vld [vmem:[#allocation9] ss:$8 sm:$0xf0]
    %v757 = vor.u32 %v755, %v756
    %v759 = vlaneseq
    %v760 = vshrl.u32 %v759, 7
    %v761 = vsub.s32 0, %v760
    %v762 = vrot.slane %v757, %v761
    %v763 = vlaneseq
    %v764 = vshrl.u32 %v763, 7
    %v765 = vsub.s32 1, %v764
    %v766 = vrot.slane %v757, %v765
    %v767 = vlaneseq
    %v768 = vshrl.u32 %v767, 7
    %v769 = vsub.s32 2, %v768
    %v770 = vrot.slane %v757, %v769
    %v771 = vlaneseq
    %v772 = vshrl.u32 %v771, 7
    %v773 = vsub.s32 3, %v772
    %v774 = vrot.slane %v757, %v773
    %v775 = vlaneseq
    %v776 = vshrl.u32 %v775, 7
    %v777 = vsub.s32 4, %v776
    %v778 = vrot.slane %v757, %v777
    %v779 = vlaneseq
    %v780 = vshrl.u32 %v779, 7
    %v781 = vsub.s32 5, %v780
    %v782 = vrot.slane %v757, %v781
    %v783 = vlaneseq
    %v784 = vshrl.u32 %v783, 7
    %v785 = vsub.s32 6, %v784
    %v786 = vrot.slane %v757, %v785
    %v787 = vlaneseq
    %v788 = vshrl.u32 %v787, 7
    %v789 = vsub.s32 7, %v788
    %v790 = vrot.slane %v757, %v789
    %v799 = vmul.f32 %v754, %v762
    %v800 = vmul.f32 %v753, %v766
    %v801 = vmul.f32 %v752, %v770
    %v802 = vmul.f32 %v751, %v774
    %v803 = vmul.f32 %v750, %v778
    %v804 = vmul.f32 %v749, %v782
    %v805 = vmul.f32 %v748, %v786
    %v806 = vmul.f32 %v747, %v790
    %807 = vrot.lane.b32.xlu0 %v720, 32
    %v808 = vpop.permute.xlu0 %807
    %809 = vrot.lane.b32.xlu0 %v721, 32
    %v810 = vpop.permute.xlu0 %809
    %811 = vrot.lane.b32.xlu0 %v722, 32
    %v812 = vpop.permute.xlu0 %811
    %813 = vrot.lane.b32.xlu0 %v723, 32
    %v814 = vpop.permute.xlu0 %813
    %815 = vrot.lane.b32.xlu0 %v724, 32
    %v816 = vpop.permute.xlu0 %815
    %817 = vrot.lane.b32.xlu0 %v725, 32
    %v818 = vpop.permute.xlu0 %817
    %819 = vrot.lane.b32.xlu0 %v726, 32
    %v820 = vpop.permute.xlu0 %819
    %821 = vrot.lane.b32.xlu0 %v727, 32
    %v822 = vpop.permute.xlu0 %821
    %vm823 = vcmp.lt.s32.totalorder %v745, 32
    %v824 = vsel %vm823, %v820, %v822
    %v825 = vsel %vm823, %v818, %v820
    %v826 = vsel %vm823, %v816, %v818
    %v827 = vsel %vm823, %v814, %v816
    %v828 = vsel %vm823, %v812, %v814
    %v829 = vsel %vm823, %v810, %v812
    %v830 = vsel %vm823, %v808, %v810
    %v831 = vsel %vm823, %v822, %v808
    %s832 = scalar_lea.vmem [#allocation9], 1
    %v833 = vld [vmem:[%s832] ss:$8 sm:$0xf]
    %v834 = vld [vmem:[%s832] ss:$8 sm:$0xf0]
    %v835 = vor.u32 %v833, %v834
    %v837 = vlaneseq
    %v838 = vshrl.u32 %v837, 7
    %v839 = vsub.s32 0, %v838
    %v840 = vrot.slane %v835, %v839
    %v841 = vlaneseq
    %v842 = vshrl.u32 %v841, 7
    %v843 = vsub.s32 1, %v842
    %v844 = vrot.slane %v835, %v843
    %v845 = vlaneseq
    %v846 = vshrl.u32 %v845, 7
    %v847 = vsub.s32 2, %v846
    %v848 = vrot.slane %v835, %v847
    %v849 = vlaneseq
    %v850 = vshrl.u32 %v849, 7
    %v851 = vsub.s32 3, %v850
    %v852 = vrot.slane %v835, %v851
    %v853 = vlaneseq
    %v854 = vshrl.u32 %v853, 7
    %v855 = vsub.s32 4, %v854
    %v856 = vrot.slane %v835, %v855
    %v857 = vlaneseq
    %v858 = vshrl.u32 %v857, 7
    %v859 = vsub.s32 5, %v858
    %v860 = vrot.slane %v835, %v859
    %v861 = vlaneseq
    %v862 = vshrl.u32 %v861, 7
    %v863 = vsub.s32 6, %v862
    %v864 = vrot.slane %v835, %v863
    %v865 = vlaneseq
    %v866 = vshrl.u32 %v865, 7
    %v867 = vsub.s32 7, %v866
    %v868 = vrot.slane %v835, %v867
    %v877 = vmul.f32 %v831, %v840
    %v878 = vmul.f32 %v830, %v844
    %v879 = vmul.f32 %v829, %v848
    %v880 = vmul.f32 %v828, %v852
    %v881 = vmul.f32 %v827, %v856
    %v882 = vmul.f32 %v826, %v860
    %v883 = vmul.f32 %v825, %v864
    %v884 = vmul.f32 %v824, %v868
    %885 = vrot.lane.b32.xlu0 %v720, 31
    %v886 = vpop.permute.xlu0 %885
    %887 = vrot.lane.b32.xlu0 %v721, 31
    %v888 = vpop.permute.xlu0 %887
    %889 = vrot.lane.b32.xlu0 %v722, 31
    %v890 = vpop.permute.xlu0 %889
    %891 = vrot.lane.b32.xlu0 %v723, 31
    %v892 = vpop.permute.xlu0 %891
    %893 = vrot.lane.b32.xlu0 %v724, 31
    %v894 = vpop.permute.xlu0 %893
    %895 = vrot.lane.b32.xlu0 %v725, 31
    %v896 = vpop.permute.xlu0 %895
    %897 = vrot.lane.b32.xlu0 %v726, 31
    %v898 = vpop.permute.xlu0 %897
    %899 = vrot.lane.b32.xlu0 %v727, 31
    %v900 = vpop.permute.xlu0 %899
    %vm901 = vcmp.lt.s32.totalorder %v745, 31
    %v902 = vsel %vm901, %v898, %v900
    %v903 = vsel %vm901, %v896, %v898
    %v904 = vsel %vm901, %v894, %v896
    %v905 = vsel %vm901, %v892, %v894
    %v906 = vsel %vm901, %v890, %v892
    %v907 = vsel %vm901, %v888, %v890
    %v908 = vsel %vm901, %v886, %v888
    %v909 = vsel %vm901, %v900, %v886
    %s910 = scalar_lea.vmem [#allocation9], 2
    %v911 = vld [vmem:[%s910] ss:$8 sm:$0xf]
    %v912 = vld [vmem:[%s910] ss:$8 sm:$0xf0]
    %v913 = vor.u32 %v911, %v912
    %v915 = vlaneseq
    %v916 = vshrl.u32 %v915, 7
    %v917 = vsub.s32 0, %v916
    %v918 = vrot.slane %v913, %v917
    %v919 = vlaneseq
    %v920 = vshrl.u32 %v919, 7
    %v921 = vsub.s32 1, %v920
    %v922 = vrot.slane %v913, %v921
    %v923 = vlaneseq
    %v924 = vshrl.u32 %v923, 7
    %v925 = vsub.s32 2, %v924
    %v926 = vrot.slane %v913, %v925
    %v927 = vlaneseq
    %v928 = vshrl.u32 %v927, 7
    %v929 = vsub.s32 3, %v928
    %v930 = vrot.slane %v913, %v929
    %v931 = vlaneseq
    %v932 = vshrl.u32 %v931, 7
    %v933 = vsub.s32 4, %v932
    %v934 = vrot.slane %v913, %v933
    %v935 = vlaneseq
    %v936 = vshrl.u32 %v935, 7
    %v937 = vsub.s32 5, %v936
    %v938 = vrot.slane %v913, %v937
    %v939 = vlaneseq
    %v940 = vshrl.u32 %v939, 7
    %v941 = vsub.s32 6, %v940
    %v942 = vrot.slane %v913, %v941
    %v943 = vlaneseq
    %v944 = vshrl.u32 %v943, 7
    %v945 = vsub.s32 7, %v944
    %v946 = vrot.slane %v913, %v945
    %v955 = vmul.f32 %v909, %v918
    %v956 = vmul.f32 %v908, %v922
    %v957 = vmul.f32 %v907, %v926
    %v958 = vmul.f32 %v906, %v930
    %v959 = vmul.f32 %v905, %v934
    %v960 = vmul.f32 %v904, %v938
    %v961 = vmul.f32 %v903, %v942
    %v962 = vmul.f32 %v902, %v946
    %963 = vrot.lane.b32.xlu0 %v720, 1
    %v964 = vpop.permute.xlu0 %963
    %965 = vrot.lane.b32.xlu0 %v721, 1
    %v966 = vpop.permute.xlu0 %965
    %967 = vrot.lane.b32.xlu0 %v722, 1
    %v968 = vpop.permute.xlu0 %967
    %969 = vrot.lane.b32.xlu0 %v723, 1
    %v970 = vpop.permute.xlu0 %969
    %971 = vrot.lane.b32.xlu0 %v724, 1
    %v972 = vpop.permute.xlu0 %971
    %973 = vrot.lane.b32.xlu0 %v725, 1
    %v974 = vpop.permute.xlu0 %973
    %975 = vrot.lane.b32.xlu0 %v726, 1
    %v976 = vpop.permute.xlu0 %975
    %977 = vrot.lane.b32.xlu0 %v727, 1
    %v978 = vpop.permute.xlu0 %977
    %vm979 = vcmp.lt.s32.totalorder %v745, 1
    %v980 = vsel %vm979, %v976, %v978
    %v981 = vsel %vm979, %v974, %v976
    %v982 = vsel %vm979, %v972, %v974
    %v983 = vsel %vm979, %v970, %v972
    %v984 = vsel %vm979, %v968, %v970
    %v985 = vsel %vm979, %v966, %v968
    %v986 = vsel %vm979, %v964, %v966
    %v987 = vsel %vm979, %v978, %v964
    %s988 = scalar_lea.vmem [#allocation9], 3
    %v989 = vld [vmem:[%s988] ss:$8 sm:$0xf]
    %v990 = vld [vmem:[%s988] ss:$8 sm:$0xf0]
    %v991 = vor.u32 %v989, %v990
    %v993 = vlaneseq
    %v994 = vshrl.u32 %v993, 7
    %v995 = vsub.s32 0, %v994
    %v996 = vrot.slane %v991, %v995
    %v997 = vlaneseq
    %v998 = vshrl.u32 %v997, 7
    %v999 = vsub.s32 1, %v998
    %v1000 = vrot.slane %v991, %v999
    %v1001 = vlaneseq
    %v1002 = vshrl.u32 %v1001, 7
    %v1003 = vsub.s32 2, %v1002
    %v1004 = vrot.slane %v991, %v1003
    %v1005 = vlaneseq
    %v1006 = vshrl.u32 %v1005, 7
    %v1007 = vsub.s32 3, %v1006
    %v1008 = vrot.slane %v991, %v1007
    %v1009 = vlaneseq
    %v1010 = vshrl.u32 %v1009, 7
    %v1011 = vsub.s32 4, %v1010
    %v1012 = vrot.slane %v991, %v1011
    %v1013 = vlaneseq
    %v1014 = vshrl.u32 %v1013, 7
    %v1015 = vsub.s32 5, %v1014
    %v1016 = vrot.slane %v991, %v1015
    %v1017 = vlaneseq
    %v1018 = vshrl.u32 %v1017, 7
    %v1019 = vsub.s32 6, %v1018
    %v1020 = vrot.slane %v991, %v1019
    %v1021 = vlaneseq
    %v1022 = vshrl.u32 %v1021, 7
    %v1023 = vsub.s32 7, %v1022
    %v1024 = vrot.slane %v991, %v1023
    %v1033 = vmul.f32 %v987, %v996
    %v1034 = vmul.f32 %v986, %v1000
    %v1035 = vmul.f32 %v985, %v1004
    %v1036 = vmul.f32 %v984, %v1008
    %v1037 = vmul.f32 %v983, %v1012
    %v1038 = vmul.f32 %v982, %v1016
    %v1039 = vmul.f32 %v981, %v1020
    %v1040 = vmul.f32 %v980, %v1024
    %1041 = vrot.lane.b32.xlu0 %v720, 127
    %v1042 = vpop.permute.xlu0 %1041
    %1043 = vrot.lane.b32.xlu0 %v721, 127
    %v1044 = vpop.permute.xlu0 %1043
    %1045 = vrot.lane.b32.xlu0 %v722, 127
    %v1046 = vpop.permute.xlu0 %1045
    %1047 = vrot.lane.b32.xlu0 %v723, 127
    %v1048 = vpop.permute.xlu0 %1047
    %1049 = vrot.lane.b32.xlu0 %v724, 127
    %v1050 = vpop.permute.xlu0 %1049
    %1051 = vrot.lane.b32.xlu0 %v725, 127
    %v1052 = vpop.permute.xlu0 %1051
    %1053 = vrot.lane.b32.xlu0 %v726, 127
    %v1054 = vpop.permute.xlu0 %1053
    %1055 = vrot.lane.b32.xlu0 %v727, 127
    %v1056 = vpop.permute.xlu0 %1055
    %vm1057 = vcmp.lt.s32.totalorder %v745, 127
    %v1058 = vsel %vm1057, %v1054, %v1056
    %v1059 = vsel %vm1057, %v1052, %v1054
    %v1060 = vsel %vm1057, %v1050, %v1052
    %v1061 = vsel %vm1057, %v1048, %v1050
    %v1062 = vsel %vm1057, %v1046, %v1048
    %v1063 = vsel %vm1057, %v1044, %v1046
    %v1064 = vsel %vm1057, %v1042, %v1044
    %v1065 = vsel %vm1057, %v1056, %v1042
    %s1066 = scalar_lea.vmem [#allocation9], 4
    %v1067 = vld [vmem:[%s1066] ss:$8 sm:$0xf]
    %v1068 = vld [vmem:[%s1066] ss:$8 sm:$0xf0]
    %v1069 = vor.u32 %v1067, %v1068
    %v1071 = vlaneseq
    %v1072 = vshrl.u32 %v1071, 7
    %v1073 = vsub.s32 0, %v1072
    %v1074 = vrot.slane %v1069, %v1073
    %v1075 = vlaneseq
    %v1076 = vshrl.u32 %v1075, 7
    %v1077 = vsub.s32 1, %v1076
    %v1078 = vrot.slane %v1069, %v1077
    %v1079 = vlaneseq
    %v1080 = vshrl.u32 %v1079, 7
    %v1081 = vsub.s32 2, %v1080
    %v1082 = vrot.slane %v1069, %v1081
    %v1083 = vlaneseq
    %v1084 = vshrl.u32 %v1083, 7
    %v1085 = vsub.s32 3, %v1084
    %v1086 = vrot.slane %v1069, %v1085
    %v1087 = vlaneseq
    %v1088 = vshrl.u32 %v1087, 7
    %v1089 = vsub.s32 4, %v1088
    %v1090 = vrot.slane %v1069, %v1089
    %v1091 = vlaneseq
    %v1092 = vshrl.u32 %v1091, 7
    %v1093 = vsub.s32 5, %v1092
    %v1094 = vrot.slane %v1069, %v1093
    %v1095 = vlaneseq
    %v1096 = vshrl.u32 %v1095, 7
    %v1097 = vsub.s32 6, %v1096
    %v1098 = vrot.slane %v1069, %v1097
    %v1099 = vlaneseq
    %v1100 = vshrl.u32 %v1099, 7
    %v1101 = vsub.s32 7, %v1100
    %v1102 = vrot.slane %v1069, %v1101
    %v1111 = vmul.f32 %v1064, %v1074
    %v1112 = vmul.f32 %v1063, %v1078
    %v1113 = vmul.f32 %v1062, %v1082
    %v1114 = vmul.f32 %v1061, %v1086
    %v1115 = vmul.f32 %v1060, %v1090
    %v1116 = vmul.f32 %v1059, %v1094
    %v1117 = vmul.f32 %v1058, %v1098
    %v1118 = vmul.f32 %v1065, %v1102
    %1119 = vrot.lane.b32.xlu0 %v720, 97
    %v1120 = vpop.permute.xlu0 %1119
    %1121 = vrot.lane.b32.xlu0 %v721, 97
    %v1122 = vpop.permute.xlu0 %1121
    %1123 = vrot.lane.b32.xlu0 %v722, 97
    %v1124 = vpop.permute.xlu0 %1123
    %1125 = vrot.lane.b32.xlu0 %v723, 97
    %v1126 = vpop.permute.xlu0 %1125
    %1127 = vrot.lane.b32.xlu0 %v724, 97
    %v1128 = vpop.permute.xlu0 %1127
    %1129 = vrot.lane.b32.xlu0 %v725, 97
    %v1130 = vpop.permute.xlu0 %1129
    %1131 = vrot.lane.b32.xlu0 %v726, 97
    %v1132 = vpop.permute.xlu0 %1131
    %1133 = vrot.lane.b32.xlu0 %v727, 97
    %v1134 = vpop.permute.xlu0 %1133
    %vm1135 = vcmp.lt.s32.totalorder %v745, 97
    %v1136 = vsel %vm1135, %v1132, %v1134
    %v1137 = vsel %vm1135, %v1130, %v1132
    %v1138 = vsel %vm1135, %v1128, %v1130
    %v1139 = vsel %vm1135, %v1126, %v1128
    %v1140 = vsel %vm1135, %v1124, %v1126
    %v1141 = vsel %vm1135, %v1122, %v1124
    %v1142 = vsel %vm1135, %v1120, %v1122
    %v1143 = vsel %vm1135, %v1134, %v1120
    %s1144 = scalar_lea.vmem [#allocation9], 5
    %v1145 = vld [vmem:[%s1144] ss:$8 sm:$0xf]
    %v1146 = vld [vmem:[%s1144] ss:$8 sm:$0xf0]
    %v1147 = vor.u32 %v1145, %v1146
    %v1149 = vlaneseq
    %v1150 = vshrl.u32 %v1149, 7
    %v1151 = vsub.s32 0, %v1150
    %v1152 = vrot.slane %v1147, %v1151
    %v1153 = vlaneseq
    %v1154 = vshrl.u32 %v1153, 7
    %v1155 = vsub.s32 1, %v1154
    %v1156 = vrot.slane %v1147, %v1155
    %v1157 = vlaneseq
    %v1158 = vshrl.u32 %v1157, 7
    %v1159 = vsub.s32 2, %v1158
    %v1160 = vrot.slane %v1147, %v1159
    %v1161 = vlaneseq
    %v1162 = vshrl.u32 %v1161, 7
    %v1163 = vsub.s32 3, %v1162
    %v1164 = vrot.slane %v1147, %v1163
    %v1165 = vlaneseq
    %v1166 = vshrl.u32 %v1165, 7
    %v1167 = vsub.s32 4, %v1166
    %v1168 = vrot.slane %v1147, %v1167
    %v1169 = vlaneseq
    %v1170 = vshrl.u32 %v1169, 7
    %v1171 = vsub.s32 5, %v1170
    %v1172 = vrot.slane %v1147, %v1171
    %v1173 = vlaneseq
    %v1174 = vshrl.u32 %v1173, 7
    %v1175 = vsub.s32 6, %v1174
    %v1176 = vrot.slane %v1147, %v1175
    %v1177 = vlaneseq
    %v1178 = vshrl.u32 %v1177, 7
    %v1179 = vsub.s32 7, %v1178
    %v1180 = vrot.slane %v1147, %v1179
    %v1189 = vmul.f32 %v1142, %v1152
    %v1190 = vmul.f32 %v1141, %v1156
    %v1191 = vmul.f32 %v1140, %v1160
    %v1192 = vmul.f32 %v1139, %v1164
    %v1193 = vmul.f32 %v1138, %v1168
    %v1194 = vmul.f32 %v1137, %v1172
    %v1195 = vmul.f32 %v1136, %v1176
    %v1196 = vmul.f32 %v1143, %v1180
    %1197 = vrot.lane.b32.xlu0 %v720, 96
    %v1198 = vpop.permute.xlu0 %1197
    %1199 = vrot.lane.b32.xlu0 %v721, 96
    %v1200 = vpop.permute.xlu0 %1199
    %1201 = vrot.lane.b32.xlu0 %v722, 96
    %v1202 = vpop.permute.xlu0 %1201
    %1203 = vrot.lane.b32.xlu0 %v723, 96
    %v1204 = vpop.permute.xlu0 %1203
    %1205 = vrot.lane.b32.xlu0 %v724, 96
    %v1206 = vpop.permute.xlu0 %1205
    %1207 = vrot.lane.b32.xlu0 %v725, 96
    %v1208 = vpop.permute.xlu0 %1207
    %1209 = vrot.lane.b32.xlu0 %v726, 96
    %v1210 = vpop.permute.xlu0 %1209
    %1211 = vrot.lane.b32.xlu0 %v727, 96
    %v1212 = vpop.permute.xlu0 %1211
    %vm1213 = vcmp.lt.s32.totalorder %v745, 96
    %v1214 = vsel %vm1213, %v1210, %v1212
    %v1215 = vsel %vm1213, %v1208, %v1210
    %v1216 = vsel %vm1213, %v1206, %v1208
    %v1217 = vsel %vm1213, %v1204, %v1206
    %v1218 = vsel %vm1213, %v1202, %v1204
    %v1219 = vsel %vm1213, %v1200, %v1202
    %v1220 = vsel %vm1213, %v1198, %v1200
    %v1221 = vsel %vm1213, %v1212, %v1198
    %s1222 = scalar_lea.vmem [#allocation9], 6
    %v1223 = vld [vmem:[%s1222] ss:$8 sm:$0xf]
    %v1224 = vld [vmem:[%s1222] ss:$8 sm:$0xf0]
    %v1225 = vor.u32 %v1223, %v1224
    %v1227 = vlaneseq
    %v1228 = vshrl.u32 %v1227, 7
    %v1229 = vsub.s32 0, %v1228
    %v1230 = vrot.slane %v1225, %v1229
    %v1231 = vlaneseq
    %v1232 = vshrl.u32 %v1231, 7
    %v1233 = vsub.s32 1, %v1232
    %v1234 = vrot.slane %v1225, %v1233
    %v1235 = vlaneseq
    %v1236 = vshrl.u32 %v1235, 7
    %v1237 = vsub.s32 2, %v1236
    %v1238 = vrot.slane %v1225, %v1237
    %v1239 = vlaneseq
    %v1240 = vshrl.u32 %v1239, 7
    %v1241 = vsub.s32 3, %v1240
    %v1242 = vrot.slane %v1225, %v1241
    %v1243 = vlaneseq
    %v1244 = vshrl.u32 %v1243, 7
    %v1245 = vsub.s32 4, %v1244
    %v1246 = vrot.slane %v1225, %v1245
    %v1247 = vlaneseq
    %v1248 = vshrl.u32 %v1247, 7
    %v1249 = vsub.s32 5, %v1248
    %v1250 = vrot.slane %v1225, %v1249
    %v1251 = vlaneseq
    %v1252 = vshrl.u32 %v1251, 7
    %v1253 = vsub.s32 6, %v1252
    %v1254 = vrot.slane %v1225, %v1253
    %v1255 = vlaneseq
    %v1256 = vshrl.u32 %v1255, 7
    %v1257 = vsub.s32 7, %v1256
    %v1258 = vrot.slane %v1225, %v1257
    %v1267 = vmul.f32 %v1220, %v1230
    %v1268 = vmul.f32 %v1219, %v1234
    %v1269 = vmul.f32 %v1218, %v1238
    %v1270 = vmul.f32 %v1217, %v1242
    %v1271 = vmul.f32 %v1216, %v1246
    %v1272 = vmul.f32 %v1215, %v1250
    %v1273 = vmul.f32 %v1214, %v1254
    %v1274 = vmul.f32 %v1221, %v1258
    %1275 = vrot.lane.b32.xlu0 %v720, 95
    %v1276 = vpop.permute.xlu0 %1275
    %1277 = vrot.lane.b32.xlu0 %v721, 95
    %v1278 = vpop.permute.xlu0 %1277
    %1279 = vrot.lane.b32.xlu0 %v722, 95
    %v1280 = vpop.permute.xlu0 %1279
    %1281 = vrot.lane.b32.xlu0 %v723, 95
    %v1282 = vpop.permute.xlu0 %1281
    %1283 = vrot.lane.b32.xlu0 %v724, 95
    %v1284 = vpop.permute.xlu0 %1283
    %1285 = vrot.lane.b32.xlu0 %v725, 95
    %v1286 = vpop.permute.xlu0 %1285
    %1287 = vrot.lane.b32.xlu0 %v726, 95
    %v1288 = vpop.permute.xlu0 %1287
    %1289 = vrot.lane.b32.xlu0 %v727, 95
    %v1290 = vpop.permute.xlu0 %1289
    %vm1291 = vcmp.lt.s32.totalorder %v745, 95
    %v1292 = vsel %vm1291, %v1288, %v1290
    %v1293 = vsel %vm1291, %v1286, %v1288
    %v1294 = vsel %vm1291, %v1284, %v1286
    %v1295 = vsel %vm1291, %v1282, %v1284
    %v1296 = vsel %vm1291, %v1280, %v1282
    %v1297 = vsel %vm1291, %v1278, %v1280
    %v1298 = vsel %vm1291, %v1276, %v1278
    %v1299 = vsel %vm1291, %v1290, %v1276
    %s1300 = scalar_lea.vmem [#allocation9], 7
    %v1301 = vld [vmem:[%s1300] ss:$8 sm:$0xf]
    %v1302 = vld [vmem:[%s1300] ss:$8 sm:$0xf0]
    %v1303 = vor.u32 %v1301, %v1302
    %v1305 = vlaneseq
    %v1306 = vshrl.u32 %v1305, 7
    %v1307 = vsub.s32 0, %v1306
    %v1308 = vrot.slane %v1303, %v1307
    %v1309 = vlaneseq
    %v1310 = vshrl.u32 %v1309, 7
    %v1311 = vsub.s32 1, %v1310
    %v1312 = vrot.slane %v1303, %v1311
    %v1313 = vlaneseq
    %v1314 = vshrl.u32 %v1313, 7
    %v1315 = vsub.s32 2, %v1314
    %v1316 = vrot.slane %v1303, %v1315
    %v1317 = vlaneseq
    %v1318 = vshrl.u32 %v1317, 7
    %v1319 = vsub.s32 3, %v1318
    %v1320 = vrot.slane %v1303, %v1319
    %v1321 = vlaneseq
    %v1322 = vshrl.u32 %v1321, 7
    %v1323 = vsub.s32 4, %v1322
    %v1324 = vrot.slane %v1303, %v1323
    %v1325 = vlaneseq
    %v1326 = vshrl.u32 %v1325, 7
    %v1327 = vsub.s32 5, %v1326
    %v1328 = vrot.slane %v1303, %v1327
    %v1329 = vlaneseq
    %v1330 = vshrl.u32 %v1329, 7
    %v1331 = vsub.s32 6, %v1330
    %v1332 = vrot.slane %v1303, %v1331
    %v1333 = vlaneseq
    %v1334 = vshrl.u32 %v1333, 7
    %v1335 = vsub.s32 7, %v1334
    %v1336 = vrot.slane %v1303, %v1335
    %v1345 = vmul.f32 %v1298, %v1308
    %v1346 = vmul.f32 %v1297, %v1312
    %v1347 = vmul.f32 %v1296, %v1316
    %v1348 = vmul.f32 %v1295, %v1320
    %v1349 = vmul.f32 %v1294, %v1324
    %v1350 = vmul.f32 %v1293, %v1328
    %v1351 = vmul.f32 %v1292, %v1332
    %v1352 = vmul.f32 %v1299, %v1336
    %v1353 = vld [vmem:[%s5] sm:$0xff]
    %v1354 = vld [vmem:[%s6] sm:$0xff]
    %1356 = vset.pattern.permute.xlu0 0
    %1357 = vperm.xlu0 %1356, %v1354
    %v1358 = vpop.permute.xlu0 %1357
    %vm1360 = vcmask 588800
    %v1362 = vsel %vm1360, %v1353, 0
    %1364 = vmatprep.subr.mxu0 %v800
    %1365 = vmatpush1.msra.mxu0 %v799
    %1366 = vmatprep.subr.mxu0 %v878
    %1367 = vmatpush1.msra.mxu0 %v877
    %1368 = vmatprep.subr.mxu0 %v956
    %1369 = vmatpush1.msra.mxu0 %v955
    %1370 = vmatprep.subr.mxu0 %v1034
    %1371 = vmatpush1.msra.mxu0 %v1033
    %1372 = vmatprep.subr.mxu0 %v721
    %1373 = vmatpush1.msra.mxu0 %v720
    %1374 = vmatprep.subr.mxu0 %v1112
    %1375 = vmatpush1.msra.mxu0 %v1111
    %1376 = vmatprep.subr.mxu0 %v1190
    %1377 = vmatpush1.msra.mxu0 %v1189
    %1378 = vmatprep.subr.mxu0 %v1268
    %1379 = vmatpush1.msra.mxu0 %v1267
    %1380 = vmatprep.subr.mxu0 %v1346
    %1381 = vmatpush1.msra.mxu0 %v1345
    %1382 = vmatprep.subr.mxu0 0.0
    %1383 = vmatpush1.msra.mxu0 0.0
    %1384 = vmatprep.subr.mxu0 0.0
    %1385 = vmatpush1.msra.mxu0 0.0
    %1386 = vmatprep.subr.mxu0 0.0
    %1387 = vmatpush1.msra.mxu0 0.0
    %1388 = vmatprep.subr.mxu0 0.0
    %1389 = vmatpush1.msra.mxu0 0.0
    %1390 = vmatprep.subr.mxu0 0.0
    %1391 = vmatpush1.msra.mxu0 0.0
    %1392 = vmatprep.subr.mxu0 0.0
    %1393 = vmatpush1.msra.mxu0 0.0
    %1394 = vmatprep.subr.mxu0 0.0
    %1395 = vmatpush1.msra.mxu0 0.0
    %1396 = vmatprep.subr.mxu0 0.0
    %1397 = vmatpush1.msra.mxu0 0.0
    %1398 = vmatprep.subr.mxu0 0.0
    %1399 = vmatpush1.msra.mxu0 0.0
    %1400 = vmatprep.subr.mxu0 0.0
    %1401 = vmatpush1.msra.mxu0 0.0
    %1402 = vmatprep.subr.mxu0 0.0
    %1403 = vmatpush1.msra.mxu0 0.0
    %1404 = vmatprep.subr.mxu0 0.0
    %1405 = vmatpush1.msra.mxu0 0.0
    %1406 = vmatprep.subr.mxu0 0.0
    %1407 = vmatpush1.msra.mxu0 0.0
    %1408 = vmatprep.subr.mxu0 0.0
    %1409 = vmatpush1.msra.mxu0 0.0
    %1410 = vmatprep.subr.mxu0 0.0
    %1411 = vmatpush1.msra.mxu0 0.0
    %1412 = vmatprep.subr.mxu0 0.0
    %1413 = vmatpush1.msra.mxu0 0.0
    %1414 = vmatprep.subr.mxu0 0.0
    %1415 = vmatpush1.msra.mxu0 0.0
    %1416 = vmatprep.subr.mxu0 0.0
    %1417 = vmatpush1.msra.mxu0 0.0
    %1418 = vmatprep.subr.mxu0 0.0
    %1419 = vmatpush1.msra.mxu0 0.0
    %1420 = vmatprep.subr.mxu0 0.0
    %1421 = vmatpush1.msra.mxu0 0.0
    %1422 = vmatprep.subr.mxu0 0.0
    %1423 = vmatpush1.msra.mxu0 0.0
    %1424 = vmatprep.subr.mxu0 0.0
    %1425 = vmatpush1.msra.mxu0 0.0
    %1426 = vmatprep.subr.mxu0 0.0
    %1427 = vmatpush1.msra.mxu0 0.0
    %1428 = vmatprep.mubr.f32.mxu0 0.0
    %1429 = vmatmul.mubr.f32.gmra.mrb[0].mxu0 %v1362
    %v1430 = vpop.f32.mrb[0].mxu0
    %v1431 = vadd.f32 %v1358, %v1430
    %v1432 = vpop.f32.mrb[0].mxu0
    %v1433 = vadd.f32 %v1358, %v1432
    %1434 = vdwg.mxu0
    %1435 = vmatprep.subr.mxu0 %v802
    %1436 = vmatpush1.msra.mxu0 %v801
    %1437 = vmatprep.subr.mxu0 %v880
    %1438 = vmatpush1.msra.mxu0 %v879
    %1439 = vmatprep.subr.mxu0 %v958
    %1440 = vmatpush1.msra.mxu0 %v957
    %1441 = vmatprep.subr.mxu0 %v1036
    %1442 = vmatpush1.msra.mxu0 %v1035
    %1443 = vmatprep.subr.mxu0 %v723
    %1444 = vmatpush1.msra.mxu0 %v722
    %1445 = vmatprep.subr.mxu0 %v1114
    %1446 = vmatpush1.msra.mxu0 %v1113
    %1447 = vmatprep.subr.mxu0 %v1192
    %1448 = vmatpush1.msra.mxu0 %v1191
    %1449 = vmatprep.subr.mxu0 %v1270
    %1450 = vmatpush1.msra.mxu0 %v1269
    %1451 = vmatprep.subr.mxu0 %v1348
    %1452 = vmatpush1.msra.mxu0 %v1347
    %1453 = vmatprep.subr.mxu0 0.0
    %1454 = vmatpush1.msra.mxu0 0.0
    %1455 = vmatprep.subr.mxu0 0.0
    %1456 = vmatpush1.msra.mxu0 0.0
    %1457 = vmatprep.subr.mxu0 0.0
    %1458 = vmatpush1.msra.mxu0 0.0
    %1459 = vmatprep.subr.mxu0 0.0
    %1460 = vmatpush1.msra.mxu0 0.0
    %1461 = vmatprep.subr.mxu0 0.0
    %1462 = vmatpush1.msra.mxu0 0.0
    %1463 = vmatprep.subr.mxu0 0.0
    %1464 = vmatpush1.msra.mxu0 0.0
    %1465 = vmatprep.subr.mxu0 0.0
    %1466 = vmatpush1.msra.mxu0 0.0
    %1467 = vmatprep.subr.mxu0 0.0
    %1468 = vmatpush1.msra.mxu0 0.0
    %1469 = vmatprep.subr.mxu0 0.0
    %1470 = vmatpush1.msra.mxu0 0.0
    %1471 = vmatprep.subr.mxu0 0.0
    %1472 = vmatpush1.msra.mxu0 0.0
    %1473 = vmatprep.subr.mxu0 0.0
    %1474 = vmatpush1.msra.mxu0 0.0
    %1475 = vmatprep.subr.mxu0 0.0
    %1476 = vmatpush1.msra.mxu0 0.0
    %1477 = vmatprep.subr.mxu0 0.0
    %1478 = vmatpush1.msra.mxu0 0.0
    %1479 = vmatprep.subr.mxu0 0.0
    %1480 = vmatpush1.msra.mxu0 0.0
    %1481 = vmatprep.subr.mxu0 0.0
    %1482 = vmatpush1.msra.mxu0 0.0
    %1483 = vmatprep.subr.mxu0 0.0
    %1484 = vmatpush1.msra.mxu0 0.0
    %1485 = vmatprep.subr.mxu0 0.0
    %1486 = vmatpush1.msra.mxu0 0.0
    %1487 = vmatprep.subr.mxu0 0.0
    %1488 = vmatpush1.msra.mxu0 0.0
    %1489 = vmatprep.subr.mxu0 0.0
    %1490 = vmatpush1.msra.mxu0 0.0
    %1491 = vmatprep.subr.mxu0 0.0
    %1492 = vmatpush1.msra.mxu0 0.0
    %1493 = vmatprep.subr.mxu0 0.0
    %1494 = vmatpush1.msra.mxu0 0.0
    %1495 = vmatprep.subr.mxu0 0.0
    %1496 = vmatpush1.msra.mxu0 0.0
    %1497 = vmatprep.subr.mxu0 0.0
    %1498 = vmatpush1.msra.mxu0 0.0
    %1499 = vmatprep.mubr.f32.mxu0 0.0
    %1500 = vmatmul.mubr.f32.gmra.mrb[0].mxu0 %v1362
    %v1501 = vpop.f32.mrb[0].mxu0
    %v1502 = vadd.f32 %v1358, %v1501
    %v1503 = vpop.f32.mrb[0].mxu0
    %v1504 = vadd.f32 %v1358, %v1503
    %1505 = vdwg.mxu0
    %1506 = vmatprep.subr.mxu0 %v804
    %1507 = vmatpush1.msra.mxu0 %v803
    %1508 = vmatprep.subr.mxu0 %v882
    %1509 = vmatpush1.msra.mxu0 %v881
    %1510 = vmatprep.subr.mxu0 %v960
    %1511 = vmatpush1.msra.mxu0 %v959
    %1512 = vmatprep.subr.mxu0 %v1038
    %1513 = vmatpush1.msra.mxu0 %v1037
    %1514 = vmatprep.subr.mxu0 %v725
    %1515 = vmatpush1.msra.mxu0 %v724
    %1516 = vmatprep.subr.mxu0 %v1116
    %1517 = vmatpush1.msra.mxu0 %v1115
    %1518 = vmatprep.subr.mxu0 %v1194
    %1519 = vmatpush1.msra.mxu0 %v1193
    %1520 = vmatprep.subr.mxu0 %v1272
    %1521 = vmatpush1.msra.mxu0 %v1271
    %1522 = vmatprep.subr.mxu0 %v1350
    %1523 = vmatpush1.msra.mxu0 %v1349
    %1524 = vmatprep.subr.mxu0 0.0
    %1525 = vmatpush1.msra.mxu0 0.0
    %1526 = vmatprep.subr.mxu0 0.0
    %1527 = vmatpush1.msra.mxu0 0.0
    %1528 = vmatprep.subr.mxu0 0.0
    %1529 = vmatpush1.msra.mxu0 0.0
    %1530 = vmatprep.subr.mxu0 0.0
    %1531 = vmatpush1.msra.mxu0 0.0
    %1532 = vmatprep.subr.mxu0 0.0
    %1533 = vmatpush1.msra.mxu0 0.0
    %1534 = vmatprep.subr.mxu0 0.0
    %1535 = vmatpush1.msra.mxu0 0.0
    %1536 = vmatprep.subr.mxu0 0.0
    %1537 = vmatpush1.msra.mxu0 0.0
    %1538 = vmatprep.subr.mxu0 0.0
    %1539 = vmatpush1.msra.mxu0 0.0
    %1540 = vmatprep.subr.mxu0 0.0
    %1541 = vmatpush1.msra.mxu0 0.0
    %1542 = vmatprep.subr.mxu0 0.0
    %1543 = vmatpush1.msra.mxu0 0.0
    %1544 = vmatprep.subr.mxu0 0.0
    %1545 = vmatpush1.msra.mxu0 0.0
    %1546 = vmatprep.subr.mxu0 0.0
    %1547 = vmatpush1.msra.mxu0 0.0
    %1548 = vmatprep.subr.mxu0 0.0
    %1549 = vmatpush1.msra.mxu0 0.0
    %1550 = vmatprep.subr.mxu0 0.0
    %1551 = vmatpush1.msra.mxu0 0.0
    %1552 = vmatprep.subr.mxu0 0.0
    %1553 = vmatpush1.msra.mxu0 0.0
    %1554 = vmatprep.subr.mxu0 0.0
    %1555 = vmatpush1.msra.mxu0 0.0
    %1556 = vmatprep.subr.mxu0 0.0
    %1557 = vmatpush1.msra.mxu0 0.0
    %1558 = vmatprep.subr.mxu0 0.0
    %1559 = vmatpush1.msra.mxu0 0.0
    %1560 = vmatprep.subr.mxu0 0.0
    %1561 = vmatpush1.msra.mxu0 0.0
    %1562 = vmatprep.subr.mxu0 0.0
    %1563 = vmatpush1.msra.mxu0 0.0
    %1564 = vmatprep.subr.mxu0 0.0
    %1565 = vmatpush1.msra.mxu0 0.0
    %1566 = vmatprep.subr.mxu0 0.0
    %1567 = vmatpush1.msra.mxu0 0.0
    %1568 = vmatprep.subr.mxu0 0.0
    %1569 = vmatpush1.msra.mxu0 0.0
    %1570 = vmatprep.mubr.f32.mxu0 0.0
    %1571 = vmatmul.mubr.f32.gmra.mrb[0].mxu0 %v1362
    %v1572 = vpop.f32.mrb[0].mxu0
    %v1573 = vadd.f32 %v1358, %v1572
    %v1574 = vpop.f32.mrb[0].mxu0
    %v1575 = vadd.f32 %v1358, %v1574
    %1576 = vdwg.mxu0
    %1577 = vmatprep.subr.mxu0 %v806
    %1578 = vmatpush1.msra.mxu0 %v805
    %1579 = vmatprep.subr.mxu0 %v884
    %1580 = vmatpush1.msra.mxu0 %v883
    %1581 = vmatprep.subr.mxu0 %v962
    %1582 = vmatpush1.msra.mxu0 %v961
    %1583 = vmatprep.subr.mxu0 %v1040
    %1584 = vmatpush1.msra.mxu0 %v1039
    %1585 = vmatprep.subr.mxu0 %v727
    %1586 = vmatpush1.msra.mxu0 %v726
    %1587 = vmatprep.subr.mxu0 %v1118
    %1588 = vmatpush1.msra.mxu0 %v1117
    %1589 = vmatprep.subr.mxu0 %v1196
    %1590 = vmatpush1.msra.mxu0 %v1195
    %1591 = vmatprep.subr.mxu0 %v1274
    %1592 = vmatpush1.msra.mxu0 %v1273
    %1593 = vmatprep.subr.mxu0 %v1352
    %1594 = vmatpush1.msra.mxu0 %v1351
    %1595 = vmatprep.subr.mxu0 0.0
    %1596 = vmatpush1.msra.mxu0 0.0
    %1597 = vmatprep.subr.mxu0 0.0
    %1598 = vmatpush1.msra.mxu0 0.0
    %1599 = vmatprep.subr.mxu0 0.0
    %1600 = vmatpush1.msra.mxu0 0.0
    %1601 = vmatprep.subr.mxu0 0.0
    %1602 = vmatpush1.msra.mxu0 0.0
    %1603 = vmatprep.subr.mxu0 0.0
    %1604 = vmatpush1.msra.mxu0 0.0
    %1605 = vmatprep.subr.mxu0 0.0
    %1606 = vmatpush1.msra.mxu0 0.0
    %1607 = vmatprep.subr.mxu0 0.0
    %1608 = vmatpush1.msra.mxu0 0.0
    %1609 = vmatprep.subr.mxu0 0.0
    %1610 = vmatpush1.msra.mxu0 0.0
    %1611 = vmatprep.subr.mxu0 0.0
    %1612 = vmatpush1.msra.mxu0 0.0
    %1613 = vmatprep.subr.mxu0 0.0
    %1614 = vmatpush1.msra.mxu0 0.0
    %1615 = vmatprep.subr.mxu0 0.0
    %1616 = vmatpush1.msra.mxu0 0.0
    %1617 = vmatprep.subr.mxu0 0.0
    %1618 = vmatpush1.msra.mxu0 0.0
    %1619 = vmatprep.subr.mxu0 0.0
    %1620 = vmatpush1.msra.mxu0 0.0
    %1621 = vmatprep.subr.mxu0 0.0
    %1622 = vmatpush1.msra.mxu0 0.0
    %1623 = vmatprep.subr.mxu0 0.0
    %1624 = vmatpush1.msra.mxu0 0.0
    %1625 = vmatprep.subr.mxu0 0.0
    %1626 = vmatpush1.msra.mxu0 0.0
    %1627 = vmatprep.subr.mxu0 0.0
    %1628 = vmatpush1.msra.mxu0 0.0
    %1629 = vmatprep.subr.mxu0 0.0
    %1630 = vmatpush1.msra.mxu0 0.0
    %1631 = vmatprep.subr.mxu0 0.0
    %1632 = vmatpush1.msra.mxu0 0.0
    %1633 = vmatprep.subr.mxu0 0.0
    %1634 = vmatpush1.msra.mxu0 0.0
    %1635 = vmatprep.subr.mxu0 0.0
    %1636 = vmatpush1.msra.mxu0 0.0
    %1637 = vmatprep.subr.mxu0 0.0
    %1638 = vmatpush1.msra.mxu0 0.0
    %1639 = vmatprep.subr.mxu0 0.0
    %1640 = vmatpush1.msra.mxu0 0.0
    %1641 = vmatprep.mubr.f32.mxu0 0.0
    %1642 = vmatmul.mubr.f32.gmra.mrb[0].mxu0 %v1362
    %v1643 = vpop.f32.mrb[0].mxu0
    %v1644 = vadd.f32 %v1358, %v1643
    %v1645 = vpop.f32.mrb[0].mxu0
    %v1646 = vadd.f32 %v1358, %v1645
    %1647 = vdwg.mxu0
    %v1648 = vmax.f32 %v1431, 0.0
    %v1649 = vmax.f32 %v1433, 0.0
    %v1650 = vmax.f32 %v1502, 0.0
    %v1651 = vmax.f32 %v1504, 0.0
    %v1652 = vmax.f32 %v1573, 0.0
    %v1653 = vmax.f32 %v1575, 0.0
    %v1654 = vmax.f32 %v1644, 0.0
    %v1655 = vmax.f32 %v1646, 0.0
    %v1656 = vmin.f32 %v1648, 6.0
    %v1657 = vmin.f32 %v1649, 6.0
    %v1658 = vmin.f32 %v1650, 6.0
    %v1659 = vmin.f32 %v1651, 6.0
    %v1660 = vmin.f32 %v1652, 6.0
    %v1661 = vmin.f32 %v1653, 6.0
    %v1662 = vmin.f32 %v1654, 6.0
    %v1663 = vmin.f32 %v1655, 6.0
    %1664 = vst [vmem:[#allocation11] sm:$0xff] %v1656
    %1665 = vst [vmem:[#allocation11 + $0x8] sm:$0xff] %v1657
    %1666 = vst [vmem:[#allocation11 + $0x10] sm:$0xff] %v1658
    %1667 = vst [vmem:[#allocation11 + $0x18] sm:$0xff] %v1659
    %1668 = vst [vmem:[#allocation11 + $0x20] sm:$0xff] %v1660
    %1669 = vst [vmem:[#allocation11 + $0x28] sm:$0xff] %v1661
    %1670 = vst [vmem:[#allocation11 + $0x30] sm:$0xff] %v1662
    %1671 = vst [vmem:[#allocation11 + $0x38] sm:$0xff] %v1663
    // Predicated region
    $region50: #{tpu_custom_call.1} parent=1 // pred_check
      _
    $region51: #{tpu_custom_call.1} parent=1 // pred_check_branch
      %1673 = sbr.rel (0) target = $region53
    $region52: #{tpu_custom_call.1} parent=1 // pred_region
      %s1675 = ssub.s32 1024, 1024
      %1676 = vsyncadd [#allocation5], %s1675
      %s1678 = sshll.u32 [#allocation11], 4
      %s1679 = int_to_ptr.vmem [resolvable:$true] %s1678
      %1681 = dma.vmem_to_hbm [thread:$0]  %s1679, 1024, %s8, [#allocation5]
    $region53: #{tpu_custom_call.1} parent=1 // pred_fallthru
      _
    // Predicated region
    $region54: #{tpu_custom_call.1} parent=1 // pred_check
      _
    $region55: #{tpu_custom_call.1} parent=1 // pred_check_branch
      %1683 = sbr.rel (0) target = $region57
    $region56: #{tpu_custom_call.1} parent=1 // pred_region
      %1684 = dma.done [#allocation5], 1024
    $region57: #{tpu_custom_call.1} parent=1 // pred_fallthru
      _
    %1685 = vsyncpa [#allocation4], 1
    %1686 = vsyncpa [#allocation7], 1
    %1687 = vsyncpa [#allocation10], 1
    %1688 = vsyncpa [#allocation5], 1

</llo_original>
